<compile_context>
chip_gen: v7x
topology: tpu7x:2x2x1
jax: 0.10.0
libtpu: 0.0.40
codegen_flags: <defaults>
</compile_context>

<pallas_src>
import functools

import jax
import jax.numpy as jnp
from jax.experimental import pallas as pl
from jax.experimental.pallas import tpu as pltpu


# --------------------------------------------------------------------------
# Hardware-aware knobs
# --------------------------------------------------------------------------
@functools.lru_cache(maxsize=None)
def _vmem_limit():
    """~70% of physical VMEM: ~90 MiB on v5e/v6e, ~44 MiB on v7x."""
    try:
        cap = int(pltpu.get_tpu_info().vmem_capacity_bytes)
        return max(32 * 1024 * 1024, min(int(cap * 0.70), 100 * 1024 * 1024))
    except Exception:
        return 44 * 1024 * 1024   # safe on every generation (v7x has 64 MiB)


@functools.lru_cache(maxsize=None)
def _default_bf16_exp():
    """bf16 EUP exponentials only on v6e / v7x (v5e and older lack bf16 EUP)."""
    try:
        kind = jax.devices()[0].device_kind.lower()
    except Exception:
        return False
    return ("v6" in kind) or ("v7" in kind)


def _choose_tile(n, preferred, align=8):
    """Largest aligned tile <= preferred that divides n (falls back to any divisor).

    TODO(synk): ragged shapes with no good divisor should be padded+masked; for
    the shapes used here all dims divide cleanly.
    """
    if n <= preferred:
        return n
    t = (preferred // align) * align
    while t >= align:
        if n % t == 0:
            return t
        t -= align
    for t in range(min(preferred, n), 0, -1):
        if n % t == 0:
            return t
    return n


# --------------------------------------------------------------------------
# Kernel 1/3: batched linear  out[c] = x @ w[c] + b[c]   (bf16 MXU, f32 acc)
# --------------------------------------------------------------------------
def _linear_kernel(x_ref, w_ref, b_ref, o_ref):
    acc = jnp.dot(x_ref[...], w_ref[...], preferred_element_type=jnp.float32)
    o_ref[...] = (acc + b_ref[...]).astype(o_ref.dtype)


def _linear3(x2d, w3, b3, *, out_dtype, tm_pref=512, tn_pref=512):
    """x2d: (M, K); w3: (C, K, N); b3: (C, 1, N)  ->  (C, M, N)."""
    M, K = x2d.shape
    C, _, N = w3.shape
    tm = _choose_tile(M, tm_pref, 8)
    tn = _choose_tile(N, tn_pref, 128)

    # Clamp tm so double-buffered tiles stay well inside the VMEM budget.
    limit = _vmem_limit()
    def _tile_bytes(tm_, tn_):
        return 2 * ((tm_ * K + K * tn_ + tn_) * x2d.dtype.itemsize
                    + tm_ * tn_ * jnp.dtype(out_dtype).itemsize)
    while tm > 8 and _tile_bytes(tm, tn) > int(0.8 * limit):
        tm = _choose_tile(M, max(8, tm // 2), 8)

    mt, nt = M // tm, N // tn
    x_bytes = x2d.size * x2d.dtype.itemsize
    w_bytes = w3.size * w3.dtype.itemsize
    # Grid order: stream the larger operand from HBM exactly once, re-stream the
    # smaller one.  Order A re-reads the weights mt times; order B re-reads the
    # activations C*nt times.
    stream_x_once = (x_bytes + mt * w_bytes) <= (w_bytes + C * nt * x_bytes)
    if stream_x_once:
        grid = (mt, C, nt)                               # x fetched once total
        x_map = lambda i, c, j: (i, 0)
        w_map = lambda i, c, j: (c, 0, j)
        b_map = lambda i, c, j: (c, 0, j)
        o_map = lambda i, c, j: (c, i, j)
    else:
        grid = (nt, C, mt)                               # weights fetched once
        x_map = lambda j, c, i: (i, 0)
        w_map = lambda j, c, i: (c, 0, j)
        b_map = lambda j, c, i: (c, 0, j)
        o_map = lambda j, c, i: (c, i, j)

    return pl.pallas_call(
        _linear_kernel,
        out_shape=jax.ShapeDtypeStruct((C, M, N), out_dtype),
        grid_spec=pltpu.PrefetchScalarGridSpec(
            num_scalar_prefetch=0,
            grid=grid,
            in_specs=[
                pl.BlockSpec((tm, K), x_map),            # activations
                pl.BlockSpec((None, K, tn), w_map),      # weight chunk
                pl.BlockSpec((None, 1, tn), b_map),      # bias chunk
            ],
            out_specs=pl.BlockSpec((None, tm, tn), o_map),
        ),
        compiler_params=pltpu.CompilerParams(
            dimension_semantics=("parallel", "parallel", "parallel"),
            vmem_limit_bytes=_vmem_limit()),
    )(x2d, w3, b3)


# --------------------------------------------------------------------------
# Kernel 2/3: flash attention, grid (B, H//hb, S//tq, S//tk), kv axis last
# --------------------------------------------------------------------------
def _flash_kernel(q_ref, k_ref, v_ref, o_ref, m_scr, l_scr, acc_scr, *,
                  use_bf16_exp):
    ki = pl.program_id(3)

    @pl.when(ki == 0)
    def _init():
        m_scr[...] = jnp.full(m_scr.shape, -jnp.inf, dtype=m_scr.dtype)
        l_scr[...] = jnp.zeros_like(l_scr)
        acc_scr[...] = jnp.zeros_like(acc_scr)

    # q is already scaled by 1/sqrt(head_dim); contraction on the last dim, so
    # no k transpose is needed (MXU consumes the transposed RHS natively).
    s = jnp.einsum('hqd,hkd->hqk', q_ref[...], k_ref[...],
                   preferred_element_type=jnp.float32)          # (hb, tq, tk)

    m_prev = m_scr[...]                                         # (hb, tq, 1)
    m_new = jnp.maximum(m_prev, jnp.max(s, axis=-1, keepdims=True))
    alpha = jnp.exp(m_prev - m_new)                             # f32 (invariant)
    x = s - m_new
    if use_bf16_exp:
        p = jnp.exp(x.astype(jnp.bfloat16))                     # bf16 EUP (v6e/v7x)
    else:
        p = jnp.exp(x)                                          # f32 (v5e & older)

    l_scr[...] = alpha * l_scr[...] + jnp.sum(
        p.astype(jnp.float32), axis=-1, keepdims=True)          # f32 l accumulation
    acc_scr[...] = alpha * acc_scr[...] + jnp.einsum(
        'hqk,hkd->hqd', p.astype(v_ref.dtype), v_ref[...],
        preferred_element_type=jnp.float32)                     # (hb, tq, hd) f32
    m_scr[...] = m_new

    @pl.when(ki == pl.num_programs(3) - 1)
    def _finalize():
        inv_l = pl.reciprocal(l_scr[...], approx=True)          # EUP slot
        o_ref[...] = (acc_scr[...] * inv_l).astype(o_ref.dtype)


def _flash_attention(q, k, v, *, use_bf16_exp, tq_pref=512, tk_pref=256):
    """q, k, v: (B, H, S, hd) -> (B, H, S, hd)."""
    B, H, S, hd = q.shape
    tq = _choose_tile(S, tq_pref, 8)
    tk = _choose_tile(S, tk_pref, 8)

    # Heads processed per grid step (amortizes grid overhead, enlarges DMAs).
    hb = 1
    for cand in range(min(H, 8), 0, -1):
        if H % cand == 0 and cand * hd <= 256:
            hb = cand
            break

    grid = (B, H // hb, S // tq, S // tk)
    kern = functools.partial(_flash_kernel, use_bf16_exp=use_bf16_exp)
    return pl.pallas_call(
        kern,
        out_shape=jax.ShapeDtypeStruct((B, H, S, hd), q.dtype),
        grid_spec=pltpu.PrefetchScalarGridSpec(
            num_scalar_prefetch=0,
            grid=grid,
            in_specs=[
                pl.BlockSpec((None, hb, tq, hd), lambda b, h, qi, ki: (b, h, qi, 0)),
                pl.BlockSpec((None, hb, tk, hd), lambda b, h, qi, ki: (b, h, ki, 0)),
                pl.BlockSpec((None, hb, tk, hd), lambda b, h, qi, ki: (b, h, ki, 0)),
            ],
            out_specs=pl.BlockSpec((None, hb, tq, hd),
                                   lambda b, h, qi, ki: (b, h, qi, 0)),
            scratch_shapes=[
                pltpu.VMEM((hb, tq, 1), jnp.float32),    # running max  m
                pltpu.VMEM((hb, tq, 1), jnp.float32),    # running sum  l
                pltpu.VMEM((hb, tq, hd), jnp.float32),   # accumulator
            ],
        ),
        compiler_params=pltpu.CompilerParams(
            dimension_semantics=("parallel", "parallel", "parallel", "arbitrary"),
            vmem_limit_bytes=_vmem_limit()),
    )(q, k, v)


# --------------------------------------------------------------------------
# Parameter preparation (runs ONCE, outside the jitted forward)
# --------------------------------------------------------------------------
def prepare_params(w_qkv, b_qkv, w_o, b_o, *, num_heads,
                   compute_dtype=jnp.bfloat16):
    """Fold softmax scale into Q, cast to bf16, and pre-layout the weights.

    w_qkv: (D, 3D), b_qkv: (1, 3D), w_o: (D, D), b_o: (1, D); all input-major
    (y = x @ W + b), i.e. transposed relative to nn.Linear's (out, in) storage.
    """
    D = w_qkv.shape[0]
    hd = D // num_heads
    scale = 1.0 / (hd ** 0.5)

    w3 = jnp.asarray(w_qkv, jnp.float32).reshape(D, 3, D).transpose(1, 0, 2)
    b3 = jnp.asarray(b_qkv, jnp.float32).reshape(3, 1, D)
    w3 = w3.at[0].multiply(scale)          # fold 1/sqrt(hd) into the Q weights
    b3 = b3.at[0].multiply(scale)

    return {
        "w_qkv": w3.astype(compute_dtype),                       # (3, D, D) bf16
        "b_qkv": b3,                                             # (3, 1, D) f32
        "w_o": jnp.asarray(w_o, jnp.float32).astype(compute_dtype)[None],  # (1,D,D)
        "b_o": jnp.asarray(b_o, jnp.float32).reshape(1, 1, D),   # (1, 1, D) f32
    }


# --------------------------------------------------------------------------
# Full forward pass (eval mode)
# --------------------------------------------------------------------------
def attention_forward(x, params, *, num_heads, use_bf16_exp=None,
                      compute_dtype=jnp.bfloat16):
    """x: (B, S, D); params from `prepare_params`.  Returns (B, S, D) in x.dtype."""
    if use_bf16_exp is None:
        use_bf16_exp = _default_bf16_exp()
    B, S, D = x.shape
    H = num_heads
    hd = D // H
    M = B * S

    # ---- QKV projection: (M, D) x (3, D, D) -> (3, M, D), q pre-scaled ----
    x2d = x.reshape(M, D).astype(compute_dtype)
    qkv = _linear3(x2d, params["w_qkv"], params["b_qkv"],
                   out_dtype=compute_dtype)                      # (3, M, D)

    # ---- ONE fused head transpose; q/k/v splits are free leading views ----
    qkv = qkv.reshape(3, B, S, H, hd).transpose(0, 1, 3, 2, 4)   # (3, B, H, S, hd)
    q, k, v = qkv[0], qkv[1], qkv[2]

    # ---- flash attention (writes head-major (B, H, S, hd)) ----
    attn = _flash_attention(q, k, v, use_bf16_exp=use_bf16_exp)

    # ---- single fused merge transpose, then lane-dense output projection ----
    attn2d = attn.transpose(0, 2, 1, 3).reshape(M, D)            # (M, D) bf16
    out = _linear3(attn2d, params["w_o"], params["b_o"],
                   out_dtype=x.dtype)[0]                         # (M, D)
    return out.reshape(B, S, D)


def attention_reference(x, w_qkv, b_qkv, w_o, b_o, *, num_heads):
    """Pure-JAX f32 reference matching torch semantics (eval mode, no dropout)."""
    B, S, D = x.shape
    hd = D // num_heads
    qkv = x @ w_qkv + b_qkv[0]
    q, k, v = jnp.split(qkv, 3, axis=-1)

    def split_heads(t):
        return t.reshape(B, S, num_heads, hd).transpose(0, 2, 1, 3)

    q, k, v = split_heads(q), split_heads(k), split_heads(v)
    scores = jnp.einsum('bhqd,bhkd->bhqk', q, k) / jnp.sqrt(hd).astype(x.dtype)
    p = jax.nn.softmax(scores, axis=-1)
    out = jnp.einsum('bhqk,bhkd->bhqd', p, v)
    out = out.transpose(0, 2, 1, 3).reshape(B, S, D)
    return out @ w_o + b_o[0]


if __name__ == "__main__":
    # Small shapes consistent with the module: batch=2, seq=8, dim=32, heads=4.
    B, S, D, H = 2, 8, 32, 4

    key = jax.random.PRNGKey(0)
    kx, kw1, kb1, kw2, kb2 = jax.random.split(key, 5)

    x = jax.random.normal(kx, (B, S, D), dtype=jnp.float32)
    w_qkv = jax.random.normal(kw1, (D, 3 * D), dtype=jnp.float32) * 0.05
    b_qkv = jax.random.normal(kb1, (1, 3 * D), dtype=jnp.float32) * 0.05
    w_o = jax.random.normal(kw2, (D, D), dtype=jnp.float32) * 0.05
    b_o = jax.random.normal(kb2, (1, D), dtype=jnp.float32) * 0.05

    # Weight prep happens ONCE, outside the jitted forward.
    params = prepare_params(w_qkv, b_qkv, w_o, b_o, num_heads=H)

    fwd = jax.jit(functools.partial(attention_forward, num_heads=H,
                                    use_bf16_exp=_default_bf16_exp()))
    out = jax.block_until_ready(fwd(x, params))

    ref = attention_reference(x, w_qkv, b_qkv, w_o, b_o, num_heads=H)
    assert out.shape == (B, S, D)
    max_err = float(jnp.max(jnp.abs(out.astype(jnp.float32) - ref)))
    # bf16 MXU inputs (+ bf16 exp on v6e/v7x) + approx reciprocal => tolerance
    # level differences only.
    assert jnp.allclose(out.astype(jnp.float32), ref, atol=2e-2, rtol=2e-2), (
        f"mismatch vs reference, max abs err = {max_err}")

    print("KERNEL_OK")
</pallas_src>

<mosaic_0001>
module attributes {stable_mosaic.version = 11 : i64} {
  func.func @_linear_kernel(%arg0: i32, %arg1: i32, %arg2: i32, %arg3: memref<16x32xbf16, #tpu.memory_space<vmem>>, %arg4: memref<1x32x32xbf16, #tpu.memory_space<vmem>>, %arg5: memref<1x1x32xf32, #tpu.memory_space<vmem>>, %arg6: memref<1x16x32xbf16, #tpu.memory_space<vmem>>) attributes {dimension_semantics = [#tpu.dimension_semantics<parallel>, #tpu.dimension_semantics<parallel>, #tpu.dimension_semantics<parallel>], iteration_bounds = array<i64: 1, 3, 1>, scalar_prefetch = 0 : i64, scratch_operands = 0 : i64, tpu.core_type = #tpu.core_type<tc>, window_params = [{transform_indices = @transform_0, window_bounds = array<i64: 16, 32>}, {transform_indices = @transform_1, window_bounds = array<i64: 1, 32, 32>}, {transform_indices = @transform_2, window_bounds = array<i64: 1, 1, 32>}, {transform_indices = @transform_3, window_bounds = array<i64: 1, 16, 32>}]} {
    %c0 = arith.constant 0 : index
    %c0_0 = arith.constant 0 : index
    %0 = vector.load %arg3[%c0, %c0_0] : memref<16x32xbf16, #tpu.memory_space<vmem>>, vector<16x32xbf16>
    %c0_1 = arith.constant 0 : index
    %c0_2 = arith.constant 0 : index
    %c0_3 = arith.constant 0 : index
    %1 = vector.load %arg4[%c0_1, %c0_2, %c0_3] : memref<1x32x32xbf16, #tpu.memory_space<vmem>>, vector<1x32x32xbf16>
    %2 = vector.shape_cast %1 : vector<1x32x32xbf16> to vector<32x32xbf16>
    %cst = arith.constant dense<0.000000e+00> : vector<16x32xf32>
    %3 = tpu.matmul %0, %2, %cst {dimension_numbers = #tpu.dot_dimension_numbers<[1], [0], [0], [1], [0, 0, 1, 1], [], []>} : vector<16x32xbf16>, vector<32x32xbf16>, vector<16x32xf32> -> vector<16x32xf32>
    %c0_4 = arith.constant 0 : index
    %c0_5 = arith.constant 0 : index
    %c0_6 = arith.constant 0 : index
    %4 = vector.load %arg5[%c0_4, %c0_5, %c0_6] : memref<1x1x32xf32, #tpu.memory_space<vmem>>, vector<1x1x32xf32>
    %5 = vector.shape_cast %4 : vector<1x1x32xf32> to vector<1x32xf32>
    %6 = vector.broadcast %5 : vector<1x32xf32> to vector<16x32xf32>
    %7 = arith.addf %3, %6 : vector<16x32xf32>
    %8 = arith.truncf %7 : vector<16x32xf32> to vector<16x32xbf16>
    %c0_7 = arith.constant 0 : index
    %c0_8 = arith.constant 0 : index
    %c0_9 = arith.constant 0 : index
    %9 = vector.load %arg6[%c0_7, %c0_8, %c0_9] : memref<1x16x32xbf16, #tpu.memory_space<vmem>>, vector<1x16x32xbf16>
    %10 = vector.shape_cast %9 : vector<1x16x32xbf16> to vector<16x32xbf16>
    %11 = vector.shape_cast %8 : vector<16x32xbf16> to vector<1x16x32xbf16>
    tpu.vector_store %arg6[%c0_7, %c0_8, %c0_9], %11 {strides = array<i32>} : memref<1x16x32xbf16, #tpu.memory_space<vmem>>, vector<1x16x32xbf16>,
    return
  }
  func.func @transform_0(%arg0: i32, %arg1: i32, %arg2: i32) -> (i32, i32) {
    %c0_i32 = arith.constant 0 : i32
    %c0_i32_0 = arith.constant 0 : i32
    return %arg0, %c0_i32 : i32, i32
  }
  func.func @transform_1(%arg0: i32, %arg1: i32, %arg2: i32) -> (i32, i32, i32) {
    %c0_i32 = arith.constant 0 : i32
    %c0_i32_0 = arith.constant 0 : i32
    return %arg1, %c0_i32, %arg2 : i32, i32, i32
  }
  func.func @transform_2(%arg0: i32, %arg1: i32, %arg2: i32) -> (i32, i32, i32) {
    %c0_i32 = arith.constant 0 : i32
    %c0_i32_0 = arith.constant 0 : i32
    return %arg1, %c0_i32, %arg2 : i32, i32, i32
  }
  func.func @transform_3(%arg0: i32, %arg1: i32, %arg2: i32) -> (i32, i32, i32) {
    %c0_i32 = arith.constant 0 : i32
    return %arg1, %arg0, %arg2 : i32, i32, i32
  }
}

module attributes {stable_mosaic.version = 11 : i64} {
  func.func @_flash_kernel(%arg0: i32, %arg1: i32, %arg2: i32, %arg3: i32, %arg4: memref<1x4x8x8xbf16, #tpu.memory_space<vmem>>, %arg5: memref<1x4x8x8xbf16, #tpu.memory_space<vmem>>, %arg6: memref<1x4x8x8xbf16, #tpu.memory_space<vmem>>, %arg7: memref<1x4x8x8xbf16, #tpu.memory_space<vmem>>, %arg8: memref<4x8x1xf32, #tpu.memory_space<vmem>>, %arg9: memref<4x8x1xf32, #tpu.memory_space<vmem>>, %arg10: memref<4x8x8xf32, #tpu.memory_space<vmem>>) attributes {dimension_semantics = [#tpu.dimension_semantics<parallel>, #tpu.dimension_semantics<parallel>, #tpu.dimension_semantics<parallel>, #tpu.dimension_semantics<arbitrary>], iteration_bounds = array<i64: 2, 1, 1, 1>, scalar_prefetch = 0 : i64, scratch_operands = 3 : i64, tpu.core_type = #tpu.core_type<tc>, window_params = [{transform_indices = @transform_0, window_bounds = array<i64: 1, 4, 8, 8>}, {transform_indices = @transform_1, window_bounds = array<i64: 1, 4, 8, 8>}, {transform_indices = @transform_2, window_bounds = array<i64: 1, 4, 8, 8>}, {transform_indices = @transform_3, window_bounds = array<i64: 1, 4, 8, 8>}]} {
    %c0_i32 = arith.constant 0 : i32
    %0 = arith.cmpi eq, %arg3, %c0_i32 : i32
    %1 = arith.extui %0 : i1 to i32
    %c0_i32_0 = arith.constant 0 : i32
    %2 = arith.cmpi ne, %1, %c0_i32_0 : i32
    scf.if %2 {
      %cst_35 = arith.constant 0xFF800000 : f32
      %36 = vector.broadcast %cst_35 : f32 to vector<4x8x1xf32>
      %c0_36 = arith.constant 0 : index
      %c0_37 = arith.constant 0 : index
      %c0_38 = arith.constant 0 : index
      %37 = vector.load %arg8[%c0_36, %c0_37, %c0_38] : memref<4x8x1xf32, #tpu.memory_space<vmem>>, vector<4x8x1xf32>
      tpu.vector_store %arg8[%c0_36, %c0_37, %c0_38], %36 {strides = array<i32>} : memref<4x8x1xf32, #tpu.memory_space<vmem>>, vector<4x8x1xf32>,
      %cst_39 = arith.constant 0.000000e+00 : f32
      %38 = vector.broadcast %cst_39 : f32 to vector<4x8x1xf32>
      %c0_40 = arith.constant 0 : index
      %c0_41 = arith.constant 0 : index
      %c0_42 = arith.constant 0 : index
      %39 = vector.load %arg9[%c0_40, %c0_41, %c0_42] : memref<4x8x1xf32, #tpu.memory_space<vmem>>, vector<4x8x1xf32>
      tpu.vector_store %arg9[%c0_40, %c0_41, %c0_42], %38 {strides = array<i32>} : memref<4x8x1xf32, #tpu.memory_space<vmem>>, vector<4x8x1xf32>,
      %cst_43 = arith.constant 0.000000e+00 : f32
      %40 = vector.broadcast %cst_43 : f32 to vector<4x8x8xf32>
      %c0_44 = arith.constant 0 : index
      %c0_45 = arith.constant 0 : index
      %c0_46 = arith.constant 0 : index
      %41 = vector.load %arg10[%c0_44, %c0_45, %c0_46] : memref<4x8x8xf32, #tpu.memory_space<vmem>>, vector<4x8x8xf32>
      tpu.vector_store %arg10[%c0_44, %c0_45, %c0_46], %40 {strides = array<i32>} : memref<4x8x8xf32, #tpu.memory_space<vmem>>, vector<4x8x8xf32>,
    } else {
    }
    %c0 = arith.constant 0 : index
    %c0_1 = arith.constant 0 : index
    %c0_2 = arith.constant 0 : index
    %c0_3 = arith.constant 0 : index
    %3 = vector.load %arg4[%c0, %c0_1, %c0_2, %c0_3] : memref<1x4x8x8xbf16, #tpu.memory_space<vmem>>, vector<1x4x8x8xbf16>
    %4 = vector.shape_cast %3 : vector<1x4x8x8xbf16> to vector<4x8x8xbf16>
    %c0_4 = arith.constant 0 : index
    %c0_5 = arith.constant 0 : index
    %c0_6 = arith.constant 0 : index
    %c0_7 = arith.constant 0 : index
    %5 = vector.load %arg5[%c0_4, %c0_5, %c0_6, %c0_7] : memref<1x4x8x8xbf16, #tpu.memory_space<vmem>>, vector<1x4x8x8xbf16>
    %6 = vector.shape_cast %5 : vector<1x4x8x8xbf16> to vector<4x8x8xbf16>
    "tpu.trace_start"() <{level = 10 : i32, message = "hqd,hkd->hqk"}> : () -> ()
    %cst = arith.constant dense<0.000000e+00> : vector<4x8x8xf32>
    %7 = tpu.matmul %4, %6, %cst {dimension_numbers = #tpu.dot_dimension_numbers<[2], [2], [1], [1], [0, 0, 0, 1, 1, 1], [0], [0]>} : vector<4x8x8xbf16>, vector<4x8x8xbf16>, vector<4x8x8xf32> -> vector<4x8x8xf32>
    "tpu.trace_stop"() : () -> ()
    %c0_8 = arith.constant 0 : index
    %c0_9 = arith.constant 0 : index
    %c0_10 = arith.constant 0 : index
    %8 = vector.load %arg8[%c0_8, %c0_9, %c0_10] : memref<4x8x1xf32, #tpu.memory_space<vmem>>, vector<4x8x1xf32>
    %cst_11 = arith.constant dense<0xFF800000> : vector<4x8xf32>
    %9 = vector.multi_reduction <maximumf>, %7, %cst_11 [2] : vector<4x8x8xf32> to vector<4x8xf32>
    %10 = vector.shape_cast %9 : vector<4x8xf32> to vector<4x8x1xf32>
    %11 = arith.maximumf %8, %10 : vector<4x8x1xf32>
    %12 = arith.subf %8, %11 : vector<4x8x1xf32>
    %13 = math.exp %12 : vector<4x8x1xf32>
    %14 = vector.broadcast %11 : vector<4x8x1xf32> to vector<4x8x8xf32>
    %15 = arith.subf %7, %14 : vector<4x8x8xf32>
    %16 = math.exp %15 : vector<4x8x8xf32>
    %c0_12 = arith.constant 0 : index
    %c0_13 = arith.constant 0 : index
    %c0_14 = arith.constant 0 : index
    %17 = vector.load %arg9[%c0_12, %c0_13, %c0_14] : memref<4x8x1xf32, #tpu.memory_space<vmem>>, vector<4x8x1xf32>
    %18 = arith.mulf %13, %17 : vector<4x8x1xf32>
    %cst_15 = arith.constant dense<0.000000e+00> : vector<4x8xf32>
    %19 = vector.multi_reduction <add>, %16, %cst_15 [2] : vector<4x8x8xf32> to vector<4x8xf32>
    %20 = vector.shape_cast %19 : vector<4x8xf32> to vector<4x8x1xf32>
    %21 = arith.addf %18, %20 : vector<4x8x1xf32>
    %c0_16 = arith.constant 0 : index
    %c0_17 = arith.constant 0 : index
    %c0_18 = arith.constant 0 : index
    %22 = vector.load %arg9[%c0_16, %c0_17, %c0_18] : memref<4x8x1xf32, #tpu.memory_space<vmem>>, vector<4x8x1xf32>
    tpu.vector_store %arg9[%c0_16, %c0_17, %c0_18], %21 {strides = array<i32>} : memref<4x8x1xf32, #tpu.memory_space<vmem>>, vector<4x8x1xf32>,
    %c0_19 = arith.constant 0 : index
    %c0_20 = arith.constant 0 : index
    %c0_21 = arith.constant 0 : index
    %23 = vector.load %arg10[%c0_19, %c0_20, %c0_21] : memref<4x8x8xf32, #tpu.memory_space<vmem>>, vector<4x8x8xf32>
    %24 = vector.broadcast %13 : vector<4x8x1xf32> to vector<4x8x8xf32>
    %25 = arith.mulf %24, %23 : vector<4x8x8xf32>
    %26 = arith.truncf %16 : vector<4x8x8xf32> to vector<4x8x8xbf16>
    %c0_22 = arith.constant 0 : index
    %c0_23 = arith.constant 0 : index
    %c0_24 = arith.constant 0 : index
    %c0_25 = arith.constant 0 : index
    %27 = vector.load %arg6[%c0_22, %c0_23, %c0_24, %c0_25] : memref<1x4x8x8xbf16, #tpu.memory_space<vmem>>, vector<1x4x8x8xbf16>
    %28 = vector.shape_cast %27 : vector<1x4x8x8xbf16> to vector<4x8x8xbf16>
    "tpu.trace_start"() <{level = 10 : i32, message = "hqk,hkd->hqd"}> : () -> ()
    %cst_26 = arith.constant dense<0.000000e+00> : vector<4x8x8xf32>
    %29 = tpu.matmul %26, %28, %cst_26 {dimension_numbers = #tpu.dot_dimension_numbers<[2], [1], [1], [2], [0, 0, 0, 1, 1, 2], [0], [0]>} : vector<4x8x8xbf16>, vector<4x8x8xbf16>, vector<4x8x8xf32> -> vector<4x8x8xf32>
    "tpu.trace_stop"() : () -> ()
    %30 = arith.addf %25, %29 : vector<4x8x8xf32>
    %c0_27 = arith.constant 0 : index
    %c0_28 = arith.constant 0 : index
    %c0_29 = arith.constant 0 : index
    %31 = vector.load %arg10[%c0_27, %c0_28, %c0_29] : memref<4x8x8xf32, #tpu.memory_space<vmem>>, vector<4x8x8xf32>
    tpu.vector_store %arg10[%c0_27, %c0_28, %c0_29], %30 {strides = array<i32>} : memref<4x8x8xf32, #tpu.memory_space<vmem>>, vector<4x8x8xf32>,
    %c0_30 = arith.constant 0 : index
    %c0_31 = arith.constant 0 : index
    %c0_32 = arith.constant 0 : index
    %32 = vector.load %arg8[%c0_30, %c0_31, %c0_32] : memref<4x8x1xf32, #tpu.memory_space<vmem>>, vector<4x8x1xf32>
    tpu.vector_store %arg8[%c0_30, %c0_31, %c0_32], %11 {strides = array<i32>} : memref<4x8x1xf32, #tpu.memory_space<vmem>>, vector<4x8x1xf32>,
    %c0_i32_33 = arith.constant 0 : i32
    %33 = arith.cmpi eq, %arg3, %c0_i32_33 : i32
    %34 = arith.extui %33 : i1 to i32
    %c0_i32_34 = arith.constant 0 : i32
    %35 = arith.cmpi ne, %34, %c0_i32_34 : i32
    scf.if %35 {
      %c0_35 = arith.constant 0 : index
      %c0_36 = arith.constant 0 : index
      %c0_37 = arith.constant 0 : index
      %36 = vector.load %arg9[%c0_35, %c0_36, %c0_37] : memref<4x8x1xf32, #tpu.memory_space<vmem>>, vector<4x8x1xf32>
      %37 = tpu.reciprocal %36 {approx = true} : vector<4x8x1xf32> -> vector<4x8x1xf32>
      %c0_38 = arith.constant 0 : index
      %c0_39 = arith.constant 0 : index
      %c0_40 = arith.constant 0 : index
      %38 = vector.load %arg10[%c0_38, %c0_39, %c0_40] : memref<4x8x8xf32, #tpu.memory_space<vmem>>, vector<4x8x8xf32>
      %39 = vector.broadcast %37 : vector<4x8x1xf32> to vector<4x8x8xf32>
      %40 = arith.mulf %38, %39 : vector<4x8x8xf32>
      %41 = arith.truncf %40 : vector<4x8x8xf32> to vector<4x8x8xbf16>
      %c0_41 = arith.constant 0 : index
      %c0_42 = arith.constant 0 : index
      %c0_43 = arith.constant 0 : index
      %c0_44 = arith.constant 0 : index
      %42 = vector.load %arg7[%c0_41, %c0_42, %c0_43, %c0_44] : memref<1x4x8x8xbf16, #tpu.memory_space<vmem>>, vector<1x4x8x8xbf16>
      %43 = vector.shape_cast %42 : vector<1x4x8x8xbf16> to vector<4x8x8xbf16>
      %44 = vector.shape_cast %41 : vector<4x8x8xbf16> to vector<1x4x8x8xbf16>
      tpu.vector_store %arg7[%c0_41, %c0_42, %c0_43, %c0_44], %44 {strides = array<i32>} : memref<1x4x8x8xbf16, #tpu.memory_space<vmem>>, vector<1x4x8x8xbf16>,
    } else {
    }
    return
  }
  func.func @transform_0(%arg0: i32, %arg1: i32, %arg2: i32, %arg3: i32) -> (i32, i32, i32, i32) {
    %c0_i32 = arith.constant 0 : i32
    %c0_i32_0 = arith.constant 0 : i32
    return %arg0, %arg1, %arg2, %c0_i32 : i32, i32, i32, i32
  }
  func.func @transform_1(%arg0: i32, %arg1: i32, %arg2: i32, %arg3: i32) -> (i32, i32, i32, i32) {
    %c0_i32 = arith.constant 0 : i32
    %c0_i32_0 = arith.constant 0 : i32
    return %arg0, %arg1, %arg3, %c0_i32 : i32, i32, i32, i32
  }
  func.func @transform_2(%arg0: i32, %arg1: i32, %arg2: i32, %arg3: i32) -> (i32, i32, i32, i32) {
    %c0_i32 = arith.constant 0 : i32
    %c0_i32_0 = arith.constant 0 : i32
    return %arg0, %arg1, %arg3, %c0_i32 : i32, i32, i32, i32
  }
  func.func @transform_3(%arg0: i32, %arg1: i32, %arg2: i32, %arg3: i32) -> (i32, i32, i32, i32) {
    %c0_i32 = arith.constant 0 : i32
    %c0_i32_0 = arith.constant 0 : i32
    return %arg0, %arg1, %arg2, %c0_i32 : i32, i32, i32, i32
  }
}

module attributes {stable_mosaic.version = 11 : i64} {
  func.func @_linear_kernel(%arg0: i32, %arg1: i32, %arg2: i32, %arg3: memref<16x32xbf16, #tpu.memory_space<vmem>>, %arg4: memref<1x32x32xbf16, #tpu.memory_space<vmem>>, %arg5: memref<1x1x32xf32, #tpu.memory_space<vmem>>, %arg6: memref<1x16x32xf32, #tpu.memory_space<vmem>>) attributes {dimension_semantics = [#tpu.dimension_semantics<parallel>, #tpu.dimension_semantics<parallel>, #tpu.dimension_semantics<parallel>], iteration_bounds = array<i64: 1, 1, 1>, scalar_prefetch = 0 : i64, scratch_operands = 0 : i64, tpu.core_type = #tpu.core_type<tc>, window_params = [{transform_indices = @transform_0, window_bounds = array<i64: 16, 32>}, {transform_indices = @transform_1, window_bounds = array<i64: 1, 32, 32>}, {transform_indices = @transform_2, window_bounds = array<i64: 1, 1, 32>}, {transform_indices = @transform_3, window_bounds = array<i64: 1, 16, 32>}]} {
    %c0 = arith.constant 0 : index
    %c0_0 = arith.constant 0 : index
    %0 = vector.load %arg3[%c0, %c0_0] : memref<16x32xbf16, #tpu.memory_space<vmem>>, vector<16x32xbf16>
    %c0_1 = arith.constant 0 : index
    %c0_2 = arith.constant 0 : index
    %c0_3 = arith.constant 0 : index
    %1 = vector.load %arg4[%c0_1, %c0_2, %c0_3] : memref<1x32x32xbf16, #tpu.memory_space<vmem>>, vector<1x32x32xbf16>
    %2 = vector.shape_cast %1 : vector<1x32x32xbf16> to vector<32x32xbf16>
    %cst = arith.constant dense<0.000000e+00> : vector<16x32xf32>
    %3 = tpu.matmul %0, %2, %cst {dimension_numbers = #tpu.dot_dimension_numbers<[1], [0], [0], [1], [0, 0, 1, 1], [], []>} : vector<16x32xbf16>, vector<32x32xbf16>, vector<16x32xf32> -> vector<16x32xf32>
    %c0_4 = arith.constant 0 : index
    %c0_5 = arith.constant 0 : index
    %c0_6 = arith.constant 0 : index
    %4 = vector.load %arg5[%c0_4, %c0_5, %c0_6] : memref<1x1x32xf32, #tpu.memory_space<vmem>>, vector<1x1x32xf32>
    %5 = vector.shape_cast %4 : vector<1x1x32xf32> to vector<1x32xf32>
    %6 = vector.broadcast %5 : vector<1x32xf32> to vector<16x32xf32>
    %7 = arith.addf %3, %6 : vector<16x32xf32>
    %c0_7 = arith.constant 0 : index
    %c0_8 = arith.constant 0 : index
    %c0_9 = arith.constant 0 : index
    %8 = vector.load %arg6[%c0_7, %c0_8, %c0_9] : memref<1x16x32xf32, #tpu.memory_space<vmem>>, vector<1x16x32xf32>
    %9 = vector.shape_cast %8 : vector<1x16x32xf32> to vector<16x32xf32>
    %10 = vector.shape_cast %7 : vector<16x32xf32> to vector<1x16x32xf32>
    tpu.vector_store %arg6[%c0_7, %c0_8, %c0_9], %10 {strides = array<i32>} : memref<1x16x32xf32, #tpu.memory_space<vmem>>, vector<1x16x32xf32>,
    return
  }
  func.func @transform_0(%arg0: i32, %arg1: i32, %arg2: i32) -> (i32, i32) {
    %c0_i32 = arith.constant 0 : i32
    %c0_i32_0 = arith.constant 0 : i32
    return %arg0, %c0_i32 : i32, i32
  }
  func.func @transform_1(%arg0: i32, %arg1: i32, %arg2: i32) -> (i32, i32, i32) {
    %c0_i32 = arith.constant 0 : i32
    %c0_i32_0 = arith.constant 0 : i32
    return %arg1, %c0_i32, %arg2 : i32, i32, i32
  }
  func.func @transform_2(%arg0: i32, %arg1: i32, %arg2: i32) -> (i32, i32, i32) {
    %c0_i32 = arith.constant 0 : i32
    %c0_i32_0 = arith.constant 0 : i32
    return %arg1, %c0_i32, %arg2 : i32, i32, i32
  }
  func.func @transform_3(%arg0: i32, %arg1: i32, %arg2: i32) -> (i32, i32, i32) {
    %c0_i32 = arith.constant 0 : i32
    return %arg1, %arg0, %arg2 : i32, i32, i32
  }
}

</mosaic_0001>

<llo_original>
// kernel: attention_forward.3
$region0: #{attention_forward.3}
  #allocation0 [shape = 'u32[]', space=smem, size = 0x4, offset = 0x4, fixed_abs, tag = 'smem constant byte address 0x4 - core index']
  #allocation1 [shape = 'u32[144,128]{1,0:T(1,128)}', space=vmem, size = 0x12000, scoped, tag = 'internal scratch']
  %s0 = inlined_call_operand.vmem [shape: bf16[16,32], index: 0, kind: input, shape index: {}]
  %s1 = inlined_call_operand.hbm [shape: bf16[3,32,32], index: 1, kind: input, shape index: {}]
  %s2 = inlined_call_operand.vmem [shape: f32[3,1,32], index: 2, kind: input, shape index: {}]
  %s3 = inlined_call_operand.vmem [shape: bf16[3,16,32], index: 3, kind: output, shape index: {}]
  %s4 = sld [smem:[#allocation0]]
  $region49: #{attention_forward.3} parent=0
    _
  %s6 = ssub.s32 1, %s4
  %s7 = scalar_select 0, %s6, %s4
  $region1: #{attention_forward.3} parent=0
    #allocation2 [shape = 'u8[16384]{0}', space=vmem, size = 0x4000, scoped, tag = 'input window, operand 1']
    #allocation3 [shape = 's32[2]{0}', space=sflag, size = 0x8, scoped, tag = 'scoped memory for attention_forward.3']
    %8 = vsyncpa [#allocation3], 0
    %s9 = scalar_lea.sflag [#allocation3], 1
    %10 = vsyncpa %s9, 0
    loop: start=0, step=1, limit=5
    $region2: #{attention_forward.3} parent=1 // loop_pre_header
      _
    $region3: #{attention_forward.3} parent=1 // loop_header
      %s12 = sphi 0, %s16
      %p13 = scmp.ge.s32.totalorder %s12, 5
      %s19 = sphi 0, %s38
      %s20 = sphi 0, %s34
      %s21 = sphi 0, %s30
      %s22 = sphi 0, %s19
      %s23 = sphi 0, %s20
      %s24 = sphi 0, %s21
      %s25 = sphi 0, %s22
      %s26 = sphi 0, %s23
      %s27 = sphi 0, %s24
      %s41 = sphi 0, %s43
      %s44 = sphi 0, %s41
      %s45 = sphi 0, %s44
      %s61 = sphi 0, %s45
      %s69 = sphi 0, %s71
      %s72 = sphi 0, %s69
      %s73 = sphi 0, %s72
      %s89 = sphi 0, %s73
      %s97 = sphi 0, %s99
      %s100 = sphi 0, %s97
      %s101 = sphi 0, %s100
      %s117 = sphi 0, %s101
      %s127 = sphi 0, %s129
      %s130 = sphi 0, %s127
      %s131 = sphi 0, %s130
      %s147 = sphi 0, %s131
    $region4: #{attention_forward.3} parent=1 // loop_header_branch
      %15 = sbr.rel (%p13) target = $region8
    $region5: #{attention_forward.3} parent=1 // loop_body
      %s17 = ssub.s32 %s12, 1
      %s18 = ssub.s32 %s12, 2
      %s28 = sadd.s32 1, %s21
      %p29 = scmp.ge.s32.totalorder %s28, 1
      %s30 = scalar_select %p29, 0, %s28
      %s31 = sadd.s32 1, %s20
      %s32 = scalar_select %p29, %s31, %s20
      %p33 = scmp.ge.s32.totalorder %s32, 3
      %s34 = scalar_select %p33, 0, %s32
      %s35 = sadd.s32 1, %s19
      %s36 = scalar_select %p33, %s35, %s19
      %p37 = scmp.ge.s32.totalorder %s36, 1
      %s38 = scalar_select %p37, 0, %s36
      %s39 = ssub.s32 %s19, %s38
      %p40 = scmp.eq.s32.totalorder %s39, 0
      %s42 = sadd.s32 %s41, 1
      %s43 = scalar_select %p40, %s41, %s42
      %p46 = pneg %p40
      %p47 = scmp.eq.s32.totalorder %s12, 2
      %p48 = por %p46, %p47
      %p49 = scmp.ne.s32.totalorder %s41, %s44
      %p50 = scmp.eq.s32.totalorder %s12, 0
      %p51 = por %p49, %p50
      %p52 = scmp.ne.s32.totalorder %s41, %s44
      %p53 = scmp.eq.s32.totalorder %s17, 2
      %p54 = por %p52, %p53
      %p55 = scmp.ne.s32.totalorder %s44, %s45
      %p56 = scmp.eq.s32.totalorder %s17, 0
      %p57 = por %p55, %p56
      %p58 = scmp.ne.s32.totalorder %s44, %s45
      %p59 = scmp.eq.s32.totalorder %s18, 2
      %p60 = por %p58, %p59
      %p62 = scmp.ne.s32.totalorder %s45, %s61
      %p63 = scmp.eq.s32.totalorder %s18, 0
      %p64 = por %p62, %p63
      %s65 = ssub.s32 %s20, %s34
      %s66 = ssub.s32 %s21, %s30
      %s67 = sor.u32 %s65, %s66
      %p68 = scmp.eq.s32.totalorder %s67, 0
      %s70 = sadd.s32 %s69, 1
      %s71 = scalar_select %p68, %s69, %s70
      %p74 = pneg %p68
      %p75 = scmp.eq.s32.totalorder %s12, 2
      %p76 = por %p74, %p75
      %p77 = scmp.ne.s32.totalorder %s69, %s72
      %p78 = scmp.eq.s32.totalorder %s12, 0
      %p79 = por %p77, %p78
      %p80 = scmp.ne.s32.totalorder %s69, %s72
      %p81 = scmp.eq.s32.totalorder %s17, 2
      %p82 = por %p80, %p81
      %p83 = scmp.ne.s32.totalorder %s72, %s73
      %p84 = scmp.eq.s32.totalorder %s17, 0
      %p85 = por %p83, %p84
      %p86 = scmp.ne.s32.totalorder %s72, %s73
      %p87 = scmp.eq.s32.totalorder %s18, 2
      %p88 = por %p86, %p87
      %p90 = scmp.ne.s32.totalorder %s73, %s89
      %p91 = scmp.eq.s32.totalorder %s18, 0
      %p92 = por %p90, %p91
      %s93 = ssub.s32 %s20, %s34
      %s94 = ssub.s32 %s21, %s30
      %s95 = sor.u32 %s93, %s94
      %p96 = scmp.eq.s32.totalorder %s95, 0
      %s98 = sadd.s32 %s97, 1
      %s99 = scalar_select %p96, %s97, %s98
      %p102 = pneg %p96
      %p103 = scmp.eq.s32.totalorder %s12, 2
      %p104 = por %p102, %p103
      %p105 = scmp.ne.s32.totalorder %s97, %s100
      %p106 = scmp.eq.s32.totalorder %s12, 0
      %p107 = por %p105, %p106
      %p108 = scmp.ne.s32.totalorder %s97, %s100
      %p109 = scmp.eq.s32.totalorder %s17, 2
      %p110 = por %p108, %p109
      %p111 = scmp.ne.s32.totalorder %s100, %s101
      %p112 = scmp.eq.s32.totalorder %s17, 0
      %p113 = por %p111, %p112
      %p114 = scmp.ne.s32.totalorder %s100, %s101
      %p115 = scmp.eq.s32.totalorder %s18, 2
      %p116 = por %p114, %p115
      %p118 = scmp.ne.s32.totalorder %s101, %s117
      %p119 = scmp.eq.s32.totalorder %s18, 0
      %p120 = por %p118, %p119
      %s121 = ssub.s32 %s20, %s34
      %s122 = ssub.s32 %s19, %s38
      %s123 = sor.u32 %s121, %s122
      %s124 = ssub.s32 %s21, %s30
      %s125 = sor.u32 %s123, %s124
      %p126 = scmp.eq.s32.totalorder %s125, 0
      %s128 = sadd.s32 %s127, 1
      %s129 = scalar_select %p126, %s127, %s128
      %p132 = pneg %p126
      %p133 = scmp.eq.s32.totalorder %s12, 2
      %p134 = por %p132, %p133
      %p135 = scmp.ne.s32.totalorder %s127, %s130
      %p136 = scmp.eq.s32.totalorder %s12, 0
      %p137 = por %p135, %p136
      %p138 = scmp.ne.s32.totalorder %s127, %s130
      %p139 = scmp.eq.s32.totalorder %s17, 2
      %p140 = por %p138, %p139
      %p141 = scmp.ne.s32.totalorder %s130, %s131
      %p142 = scmp.eq.s32.totalorder %s17, 0
      %p143 = por %p141, %p142
      %p144 = scmp.ne.s32.totalorder %s130, %s131
      %p145 = scmp.eq.s32.totalorder %s18, 2
      %p146 = por %p144, %p145
      %p148 = scmp.ne.s32.totalorder %s131, %s147
      %p149 = scmp.eq.s32.totalorder %s18, 0
      %p150 = por %p148, %p149
      %p151 = scmp.le.s32.totalorder 1, %s12
      %p152 = scmp.lt.s32.totalorder %s12, 4
      %p153 = pnand %p151, %p152
      %p154 = pneg %p153
      // Predicated region
      $region9: #{attention_forward.3} parent=5 // pred_check
        _
      $region10: #{attention_forward.3} parent=5 // pred_check_branch
        %156 = sbr.rel (%p153) target = $region12
      $region11: #{attention_forward.3} parent=5 // pred_region
        %s157 = ssub.s32 %s12, 1
        // Predicated region
        $region13: #{attention_forward.3} parent=11 // pred_check
          %p158 = pneg %p57
        $region14: #{attention_forward.3} parent=11 // pred_check_branch
          %160 = sbr.rel (%p158) target = $region16
        $region15: #{attention_forward.3} parent=11 // pred_region
          %s161 = smul.u32 2, %s22
          %p162 = scmp.lt.s32.totalorder %s161, 1
          %s163 = scalar_select %p162, %s161, 1
          %s164 = smul.addr %s163, 4
          %s165 = scalar_lea.vmem %s0, %s164
          %s166 = smul.u32 2, %s22
        $region16: #{attention_forward.3} parent=11 // pred_fallthru
          _
      $region12: #{attention_forward.3} parent=5 // pred_fallthru
        _
      %p167 = scmp.lt.s32.totalorder %s12, 3
      // Predicated region
      $region17: #{attention_forward.3} parent=5 // pred_check
        %p168 = pneg %p167
      $region18: #{attention_forward.3} parent=5 // pred_check_branch
        %170 = sbr.rel (%p168) target = $region20
      $region19: #{attention_forward.3} parent=5 // pred_region
        // Predicated region
        $region21: #{attention_forward.3} parent=19 // pred_check
          %p171 = pneg %p79
        $region22: #{attention_forward.3} parent=19 // pred_check_branch
          %173 = sbr.rel (%p171) target = $region24
        $region23: #{attention_forward.3} parent=19 // pred_region
          %s174 = sand.u32 %s69, 1
          %s175 = scalar_lea.sflag [#allocation3], %s174
          %s176 = sand.u32 %s69, 1
          %s177 = smul.addr %s176, 16
          %s178 = scalar_lea.vmem [#allocation2], %s177
          %s180 = ssub.s32 256, 256
          %181 = vsyncadd %s175, %s180
          %s182 = smul.addr %s20, 4
          %s183 = sadd.s32 %s21, %s182
          %s184 = smul.addr %s183, 64
          %s185 = scalar_lea.hbm %s1, %s184
          %s186 = sshll.u32 %s178, 4
          %s187 = int_to_ptr.vmem [resolvable:$true] %s186
          %192 = dma.hbm_to_vmem [thread:$0]  %s185, 256, %s187, %s175, 64, 64, 4
        $region24: #{attention_forward.3} parent=19 // pred_fallthru
          _
        // Predicated region
        $region25: #{attention_forward.3} parent=19 // pred_check
          %p193 = pneg %p107
        $region26: #{attention_forward.3} parent=19 // pred_check_branch
          %195 = sbr.rel (%p193) target = $region28
        $region27: #{attention_forward.3} parent=19 // pred_region
          %p196 = scmp.lt.s32.totalorder %s20, 2
          %s197 = scalar_select %p196, %s20, 2
          %p198 = scmp.lt.s32.totalorder %s21, 0
          %s199 = scalar_select %p198, %s21, 0
          %s200 = sadd.s32 %s199, %s197
          %s201 = scalar_lea.vmem %s2, %s200
        $region28: #{attention_forward.3} parent=19 // pred_fallthru
          _
      $region20: #{attention_forward.3} parent=5 // pred_fallthru
        _
      %p202 = scmp.le.s32.totalorder 1, %s12
      %p203 = scmp.lt.s32.totalorder %s12, 4
      %p204 = pnand %p202, %p203
      %p205 = pneg %p204
      // Predicated region
      $region29: #{attention_forward.3} parent=5 // pred_check
        _
      $region30: #{attention_forward.3} parent=5 // pred_check_branch
        %207 = sbr.rel (%p204) target = $region32
      $region31: #{attention_forward.3} parent=5 // pred_region
        %s208 = ssub.s32 %s12, 1
        %s209 = sand.u32 %s72, 1
        %s210 = scalar_lea.sflag [#allocation3], %s209
        %s211 = sand.u32 %s72, 1
        %s212 = smul.addr %s211, 16
        %s213 = scalar_lea.vmem [#allocation2], %s212
        // Predicated region
        $region33: #{attention_forward.3} parent=31 // pred_check
          %p214 = pneg %p85
        $region34: #{attention_forward.3} parent=31 // pred_check_branch
          %216 = sbr.rel (%p214) target = $region36
        $region35: #{attention_forward.3} parent=31 // pred_region
          %217 = dma.done %s210, 256
        $region36: #{attention_forward.3} parent=31 // pred_fallthru
          _
        %s218 = smul.u32 2, %s22
        %p219 = scmp.lt.s32.totalorder %s218, 1
        %s220 = scalar_select %p219, %s218, 1
        %s221 = smul.addr %s220, 4
        %s222 = scalar_lea.vmem %s0, %s221
        %p223 = pneg %p57
        %p224 = pneg %p54
        %s225 = sand.u32 %s72, 1
        %s226 = scalar_lea.sflag [#allocation3], %s225
        %s227 = sand.u32 %s72, 1
        %s228 = smul.addr %s227, 16
        %s229 = scalar_lea.vmem [#allocation2], %s228
        %p230 = pneg %p85
        %p231 = pneg %p82
        %p232 = scmp.lt.s32.totalorder %s23, 2
        %s233 = scalar_select %p232, %s23, 2
        %p234 = scmp.lt.s32.totalorder %s24, 0
        %s235 = scalar_select %p234, %s24, 0
        %s236 = sadd.s32 %s235, %s233
        %s237 = scalar_lea.vmem %s2, %s236
        %p238 = pneg %p113
        %p239 = pneg %p110
        %p240 = pneg %p143
        %p241 = pneg %p140
        %s242 = smul.u32 2, %s22
        %p243 = scmp.lt.s32.totalorder %s23, 2
        %s244 = scalar_select %p243, %s23, 2
        %p245 = scmp.lt.s32.totalorder %s242, 1
        %s246 = scalar_select %p245, %s242, 1
        %p247 = scmp.lt.s32.totalorder %s24, 0
        %s248 = scalar_select %p247, %s24, 0
        %s249 = sadd.s32 %s248, %s246
        %s250 = smul.addr %s244, 2
        %s251 = sadd.s32 %s249, %s250
        %s252 = smul.addr %s251, 4
        %s253 = scalar_lea.vmem %s3, %s252
        %s254 = smul.u32 2, %s22
        %p255 = scmp.lt.s32.totalorder %s254, 1
        %s256 = scalar_select %p255, %s254, 1
        %s257 = smul.addr %s256, 4
        %s258 = scalar_lea.vmem %s0, %s257
        %s259 = smul.u32 2, %s22
        %p260 = scmp.lt.s32.totalorder %s23, 2
        %s261 = scalar_select %p260, %s23, 2
        %p262 = scmp.lt.s32.totalorder %s24, 0
        %s263 = scalar_select %p262, %s24, 0
        %s264 = sadd.s32 %s263, %s261
        %s265 = scalar_lea.vmem %s2, %s264
        %s266 = smul.u32 2, %s22
        %p267 = scmp.lt.s32.totalorder %s23, 2
        %s268 = scalar_select %p267, %s23, 2
        %p269 = scmp.lt.s32.totalorder %s266, 1
        %s270 = scalar_select %p269, %s266, 1
        %p271 = scmp.lt.s32.totalorder %s24, 0
        %s272 = scalar_select %p271, %s24, 0
        %s273 = sadd.s32 %s272, %s270
        %s274 = smul.addr %s268, 2
        %s275 = sadd.s32 %s273, %s274
        %s276 = smul.addr %s275, 4
        %s277 = scalar_lea.vmem %s3, %s276
        %s278 = smul.u32 2, %s22
        %v280 = vld [vmem:[%s258] sm:$0xf]
        %v281 = vld [vmem:[%s258 + $0x4] sm:$0xf]
        %v282 = vld [vmem:[%s213] sm:$0xf]
        %v283 = vld [vmem:[%s213 + $0x4] sm:$0xf]
        %v284 = vld [vmem:[%s213 + $0x8] sm:$0xf]
        %v285 = vld [vmem:[%s213 + $0xc] sm:$0xf]
        %v286 = vld [vmem:[%s265] sm:$0x1]
        %v288 = vlaneseq
        %v289 = vshrl.u32 %v288, 7
        %v290 = vsub.s32 0, %v289
        %v291 = vrot.slane %v286, %v290
        %v295 = vunpack.c.l.b16 %v280
        %v296 = vunpack.c.l.b16 %v281
        %v297 = vpack.c.b16 %v296, %v295
        %v302 = vunpack.c.l.b16 %v282
        %v303 = vunpack.c.l.b16 %v283
        %v304 = vunpack.c.l.b16 %v284
        %v305 = vunpack.c.l.b16 %v285
        %v306 = vpack.c.b16 %v303, %v302
        %v307 = vpack.c.b16 %v305, %v304
        %vm310 = vcmask 261120
        %v312 = vsel %vm310, %v297, 0
        %314 = vmatprep.subr.bf16.mxu0 0
        %315 = vmatpush1.bf16.msra.mxu0 %v306
        %316 = vmatprep.subr.bf16.mxu0 0
        %317 = vmatpush1.bf16.msra.mxu0 %v307
        %318 = vmatprep.subr.bf16.mxu0 0
        %319 = vmatpush1.bf16.msra.mxu0 0
        %320 = vmatprep.subr.bf16.mxu0 0
        %321 = vmatpush1.bf16.msra.mxu0 0
        %322 = vmatprep.subr.bf16.mxu0 0
        %323 = vmatpush1.bf16.msra.mxu0 0
        %324 = vmatprep.subr.bf16.mxu0 0
        %325 = vmatpush1.bf16.msra.mxu0 0
        %326 = vmatprep.subr.bf16.mxu0 0
        %327 = vmatpush1.bf16.msra.mxu0 0
        %328 = vmatprep.subr.bf16.mxu0 0
        %329 = vmatpush1.bf16.msra.mxu0 0
        %330 = vmatprep.subr.bf16.mxu0 0
        %331 = vmatpush1.bf16.msra.mxu0 0
        %332 = vmatprep.subr.bf16.mxu0 0
        %333 = vmatpush1.bf16.msra.mxu0 0
        %334 = vmatprep.subr.bf16.mxu0 0
        %335 = vmatpush1.bf16.msra.mxu0 0
        %336 = vmatprep.subr.bf16.mxu0 0
        %337 = vmatpush1.bf16.msra.mxu0 0
        %338 = vmatprep.subr.bf16.mxu0 0
        %339 = vmatpush1.bf16.msra.mxu0 0
        %340 = vmatprep.subr.bf16.mxu0 0
        %341 = vmatpush1.bf16.msra.mxu0 0
        %342 = vmatprep.subr.bf16.mxu0 0
        %343 = vmatpush1.bf16.msra.mxu0 0
        %344 = vmatprep.subr.bf16.mxu0 0
        %345 = vmatpush1.bf16.msra.mxu0 0
        %346 = vmatprep.mubr.bf16.mxu0 0
        %347 = vmatmul.mubr.bf16.gmra.mrb[0].mxu0 %v312
        %v348 = vpop.f32.mrb[0].mxu0
        %v349 = vadd.f32 %v291, %v348
        %v350 = vpop.f32.mrb[0].mxu0
        %v351 = vpop.f32.mrb[0].mxu0
        %v352 = vadd.f32 %v291, %v351
        %v353 = vpop.f32.mrb[0].mxu0
        %354 = vdwg.mxu0
        %v355 = vpack.c.bf16 %v352, %v349
        %v357 = vunpack.c.l.b16 %v355
        %v358 = vunpack.c.h.b16 %v355
        %v359 = vpack.c.b16 %v357, %v357
        %v360 = vpack.c.b16 %v358, %v358
        %vm363 = vcmask 257024
        %364 = vst.msk [vmem:[%s277] sm:$0xf] %vm363, %v359
        %365 = vst.msk [vmem:[%s277 + $0x4] sm:$0xf] %vm363, %v360
        %s366 = smul.u32 2, %s22
        %p367 = scmp.lt.s32.totalorder %s23, 2
        %s368 = scalar_select %p367, %s23, 2
        %p369 = scmp.lt.s32.totalorder %s366, 1
        %s370 = scalar_select %p369, %s366, 1
        %p371 = scmp.lt.s32.totalorder %s24, 0
        %s372 = scalar_select %p371, %s24, 0
        %s373 = sadd.s32 %s372, %s370
        %s374 = smul.addr %s368, 2
        %s375 = sadd.s32 %s373, %s374
        %s376 = smul.addr %s375, 4
        %s377 = scalar_lea.vmem %s3, %s376
        // Predicated region
        $region37: #{attention_forward.3} parent=31 // pred_check
          %p378 = pneg %p140
        $region38: #{attention_forward.3} parent=31 // pred_check_branch
          %380 = sbr.rel (%p378) target = $region40
        $region39: #{attention_forward.3} parent=31 // pred_region
          %s381 = smul.u32 2, %s22
        $region40: #{attention_forward.3} parent=31 // pred_fallthru
          _
      $region32: #{attention_forward.3} parent=5 // pred_fallthru
        _
      %p382 = scmp.le.s32.totalorder 2, %s12
      // Predicated region
      $region41: #{attention_forward.3} parent=5 // pred_check
        %p383 = pneg %p382
      $region42: #{attention_forward.3} parent=5 // pred_check_branch
        %385 = sbr.rel (%p383) target = $region44
      $region43: #{attention_forward.3} parent=5 // pred_region
        %s386 = ssub.s32 %s12, 2
        // Predicated region
        $region45: #{attention_forward.3} parent=43 // pred_check
          %p387 = pneg %p146
        $region46: #{attention_forward.3} parent=43 // pred_check_branch
          %389 = sbr.rel (%p387) target = $region48
        $region47: #{attention_forward.3} parent=43 // pred_region
          %s390 = smul.u32 2, %s25
          %p391 = scmp.lt.s32.totalorder %s26, 2
          %s392 = scalar_select %p391, %s26, 2
          %p393 = scmp.lt.s32.totalorder %s390, 1
          %s394 = scalar_select %p393, %s390, 1
          %p395 = scmp.lt.s32.totalorder %s27, 0
          %s396 = scalar_select %p395, %s27, 0
          %s397 = sadd.s32 %s396, %s394
          %s398 = smul.addr %s392, 2
          %s399 = sadd.s32 %s397, %s398
          %s400 = smul.addr %s399, 4
          %s401 = scalar_lea.vmem %s3, %s400
        $region48: #{attention_forward.3} parent=43 // pred_fallthru
          _
      $region44: #{attention_forward.3} parent=5 // pred_fallthru
        _
    $region6: #{attention_forward.3} parent=1 // loop_footer
      %s16 = sadd.s32 1, %s12
    $region7: #{attention_forward.3} parent=1 // loop_footer_branch
      %11 = sbr.rel target = $region3
    $region8: #{attention_forward.3} parent=1 // loop_exit
      _
    %402 = vsyncpa [#allocation3], 1
    %s403 = scalar_lea.sflag [#allocation3], 1
    %404 = vsyncpa %s403, 1

// kernel: attention_forward.5
$region0: #{attention_forward.5}
  #allocation0 [shape = 'u32[]', space=smem, size = 0x4, offset = 0x4, fixed_abs, tag = 'smem constant byte address 0x4 - core index']
  #allocation1 [shape = 'u32[144,128]{1,0:T(1,128)}', space=vmem, size = 0x12000, scoped, tag = 'internal scratch']
  %s0 = inlined_call_operand.vmem [shape: bf16[16,32], index: 0, kind: input, shape index: {}]
  %s1 = inlined_call_operand.vmem [shape: bf16[1,32,32], index: 1, kind: input, shape index: {}]
  %s2 = inlined_call_operand.vmem [shape: f32[1,1,32], index: 2, kind: input, shape index: {}]
  %s3 = inlined_call_operand.hbm [shape: f32[1,16,32], index: 3, kind: output, shape index: {}]
  %s4 = sld [smem:[#allocation0]]
  $region22: #{attention_forward.5} parent=0
    _
  %s6 = ssub.s32 1, %s4
  %s7 = scalar_select 0, %s6, %s4
  $region1: #{attention_forward.5} parent=0
    #allocation2 [shape = 'u8[8192]{0}', space=vmem, size = 0x2000, scoped, tag = 'output window, operand 0, single buffered']
    #allocation3 [shape = 's32[1]{0}', space=sflag, size = 0x4, scoped, tag = 'scoped memory for attention_forward.5']
    %8 = vsyncpa [#allocation3], 0
    // Predicated region
    $region2: #{attention_forward.5} parent=1 // pred_check
      _
    $region3: #{attention_forward.5} parent=1 // pred_check_branch
      %10 = sbr.rel (0) target = $region5
    $region4: #{attention_forward.5} parent=1 // pred_region
      _
    $region5: #{attention_forward.5} parent=1 // pred_fallthru
      _
    // Predicated region
    $region6: #{attention_forward.5} parent=1 // pred_check
      _
    $region7: #{attention_forward.5} parent=1 // pred_check_branch
      %12 = sbr.rel (0) target = $region9
    $region8: #{attention_forward.5} parent=1 // pred_region
      _
    $region9: #{attention_forward.5} parent=1 // pred_fallthru
      _
    // Predicated region
    $region10: #{attention_forward.5} parent=1 // pred_check
      _
    $region11: #{attention_forward.5} parent=1 // pred_check_branch
      %14 = sbr.rel (0) target = $region13
    $region12: #{attention_forward.5} parent=1 // pred_region
      _
    $region13: #{attention_forward.5} parent=1 // pred_fallthru
      _
    %v16 = vld [vmem:[%s0] sm:$0xf]
    %v17 = vld [vmem:[%s0 + $0x4] sm:$0xf]
    %v18 = vld [vmem:[%s1] sm:$0xf]
    %v19 = vld [vmem:[%s1 + $0x4] sm:$0xf]
    %v20 = vld [vmem:[%s1 + $0x8] sm:$0xf]
    %v21 = vld [vmem:[%s1 + $0xc] sm:$0xf]
    %v22 = vld [vmem:[%s2] sm:$0x1]
    %v24 = vlaneseq
    %v25 = vshrl.u32 %v24, 7
    %v26 = vsub.s32 0, %v25
    %v27 = vrot.slane %v22, %v26
    %v31 = vunpack.c.l.b16 %v16
    %v32 = vunpack.c.l.b16 %v17
    %v33 = vpack.c.b16 %v32, %v31
    %v38 = vunpack.c.l.b16 %v18
    %v39 = vunpack.c.l.b16 %v19
    %v40 = vunpack.c.l.b16 %v20
    %v41 = vunpack.c.l.b16 %v21
    %v42 = vpack.c.b16 %v39, %v38
    %v43 = vpack.c.b16 %v41, %v40
    %vm46 = vcmask 261120
    %v48 = vsel %vm46, %v33, 0
    %50 = vmatprep.subr.bf16.mxu0 0
    %51 = vmatpush1.bf16.msra.mxu0 %v42
    %52 = vmatprep.subr.bf16.mxu0 0
    %53 = vmatpush1.bf16.msra.mxu0 %v43
    %54 = vmatprep.subr.bf16.mxu0 0
    %55 = vmatpush1.bf16.msra.mxu0 0
    %56 = vmatprep.subr.bf16.mxu0 0
    %57 = vmatpush1.bf16.msra.mxu0 0
    %58 = vmatprep.subr.bf16.mxu0 0
    %59 = vmatpush1.bf16.msra.mxu0 0
    %60 = vmatprep.subr.bf16.mxu0 0
    %61 = vmatpush1.bf16.msra.mxu0 0
    %62 = vmatprep.subr.bf16.mxu0 0
    %63 = vmatpush1.bf16.msra.mxu0 0
    %64 = vmatprep.subr.bf16.mxu0 0
    %65 = vmatpush1.bf16.msra.mxu0 0
    %66 = vmatprep.subr.bf16.mxu0 0
    %67 = vmatpush1.bf16.msra.mxu0 0
    %68 = vmatprep.subr.bf16.mxu0 0
    %69 = vmatpush1.bf16.msra.mxu0 0
    %70 = vmatprep.subr.bf16.mxu0 0
    %71 = vmatpush1.bf16.msra.mxu0 0
    %72 = vmatprep.subr.bf16.mxu0 0
    %73 = vmatpush1.bf16.msra.mxu0 0
    %74 = vmatprep.subr.bf16.mxu0 0
    %75 = vmatpush1.bf16.msra.mxu0 0
    %76 = vmatprep.subr.bf16.mxu0 0
    %77 = vmatpush1.bf16.msra.mxu0 0
    %78 = vmatprep.subr.bf16.mxu0 0
    %79 = vmatpush1.bf16.msra.mxu0 0
    %80 = vmatprep.subr.bf16.mxu0 0
    %81 = vmatpush1.bf16.msra.mxu0 0
    %82 = vmatprep.mubr.bf16.mxu0 0
    %83 = vmatmul.mubr.bf16.gmra.mrb[0].mxu0 %v48
    %v84 = vpop.f32.mrb[0].mxu0
    %v85 = vadd.f32 %v27, %v84
    %v86 = vpop.f32.mrb[0].mxu0
    %v87 = vpop.f32.mrb[0].mxu0
    %v88 = vadd.f32 %v27, %v87
    %v89 = vpop.f32.mrb[0].mxu0
    %90 = vdwg.mxu0
    %91 = vst.msk [vmem:[#allocation2] sm:$0xff] %vm46, %v85
    %92 = vst.msk [vmem:[#allocation2 + $0x8] sm:$0xff] %vm46, %v88
    // Predicated region
    $region14: #{attention_forward.5} parent=1 // pred_check
      _
    $region15: #{attention_forward.5} parent=1 // pred_check_branch
      %94 = sbr.rel (0) target = $region17
    $region16: #{attention_forward.5} parent=1 // pred_region
      %s96 = ssub.s32 256, 256
      %97 = vsyncadd [#allocation3], %s96
      %s98 = sshll.u32 [#allocation2], 4
      %s99 = int_to_ptr.vmem [resolvable:$true] %s98
      %104 = dma.vmem_to_hbm [thread:$0]  %s99, 256, %s3, [#allocation3], 128, 128, 8
    $region17: #{attention_forward.5} parent=1 // pred_fallthru
      _
    // Predicated region
    $region18: #{attention_forward.5} parent=1 // pred_check
      _
    $region19: #{attention_forward.5} parent=1 // pred_check_branch
      %106 = sbr.rel (0) target = $region21
    $region20: #{attention_forward.5} parent=1 // pred_region
      %107 = dma.done [#allocation3], 256
    $region21: #{attention_forward.5} parent=1 // pred_fallthru
      _
    %108 = vsyncpa [#allocation3], 1

// kernel: attention_forward.4
$region0: #{attention_forward.4}
  #allocation0 [shape = 'u32[]', space=smem, size = 0x4, offset = 0x4, fixed_abs, tag = 'smem constant byte address 0x4 - core index']
  #allocation1 [shape = 'u32[144,128]{1,0:T(1,128)}', space=vmem, size = 0x12000, scoped, tag = 'internal scratch']
  #allocation2 [shape = 'f32[4,8,1]{2,1,0:T(8,128)}', space=vmem, size = 0x4000, scoped, tag = 'scratch operand']
  #allocation3 [shape = 'f32[4,8,1]{2,1,0:T(8,128)}', space=vmem, size = 0x4000, scoped, tag = 'scratch operand']
  #allocation4 [shape = 'f32[4,8,8]{2,1,0:T(8,128)}', space=vmem, size = 0x4000, scoped, tag = 'scratch operand']
  %s0 = inlined_call_operand.vmem [shape: bf16[2,4,8,8], index: 0, kind: input, shape index: {}]
  %s1 = inlined_call_operand.vmem [shape: bf16[2,4,8,8], index: 1, kind: input, shape index: {}]
  %s2 = inlined_call_operand.vmem [shape: bf16[2,4,8,8], index: 2, kind: input, shape index: {}]
  %s3 = inlined_call_operand.vmem [shape: bf16[2,4,8,8], index: 3, kind: output, shape index: {}]
  %s4 = sld [smem:[#allocation0]]
  $region53: #{attention_forward.4} parent=0
    _
  %s6 = ssub.s32 1, %s4
  %s7 = scalar_select 0, %s6, %s4
  loop: start=0, step=1, limit=4
  $region2: #{attention_forward.4} parent=0 // loop_pre_header
    _
  $region3: #{attention_forward.4} parent=0 // loop_header
    %s9 = sphi 0, %s13
    %p10 = scmp.ge.s32.totalorder %s9, 4
    %s16 = sphi 0, %s42
    %s17 = sphi 0, %s38
    %s18 = sphi 0, %s34
    %s19 = sphi 0, %s30
    %s20 = sphi 0, %s16
    %s21 = sphi 0, %s17
    %s22 = sphi 0, %s18
    %s23 = sphi 0, %s19
    %s24 = sphi 0, %s20
    %s25 = sphi 0, %s21
    %s26 = sphi 0, %s22
    %s27 = sphi 0, %s23
    %s49 = sphi 0, %s51
    %s52 = sphi 0, %s49
    %s53 = sphi 0, %s52
    %s69 = sphi 0, %s53
    %s79 = sphi 0, %s81
    %s82 = sphi 0, %s79
    %s83 = sphi 0, %s82
    %s99 = sphi 0, %s83
    %s109 = sphi 0, %s111
    %s112 = sphi 0, %s109
    %s113 = sphi 0, %s112
    %s129 = sphi 0, %s113
    %s139 = sphi 0, %s141
    %s142 = sphi 0, %s139
    %s143 = sphi 0, %s142
    %s159 = sphi 0, %s143
  $region4: #{attention_forward.4} parent=0 // loop_header_branch
    %12 = sbr.rel (%p10) target = $region8
  $region5: #{attention_forward.4} parent=0 // loop_body
    %s14 = ssub.s32 %s9, 1
    %s15 = ssub.s32 %s9, 2
    %s28 = sadd.s32 1, %s19
    %p29 = scmp.ge.s32.totalorder %s28, 1
    %s30 = scalar_select %p29, 0, %s28
    %s31 = sadd.s32 1, %s18
    %s32 = scalar_select %p29, %s31, %s18
    %p33 = scmp.ge.s32.totalorder %s32, 1
    %s34 = scalar_select %p33, 0, %s32
    %s35 = sadd.s32 1, %s17
    %s36 = scalar_select %p33, %s35, %s17
    %p37 = scmp.ge.s32.totalorder %s36, 1
    %s38 = scalar_select %p37, 0, %s36
    %s39 = sadd.s32 1, %s16
    %s40 = scalar_select %p37, %s39, %s16
    %p41 = scmp.ge.s32.totalorder %s40, 2
    %s42 = scalar_select %p41, 0, %s40
    %s43 = ssub.s32 %s16, %s42
    %s44 = ssub.s32 %s17, %s38
    %s45 = sor.u32 %s43, %s44
    %s46 = ssub.s32 %s18, %s34
    %s47 = sor.u32 %s45, %s46
    %p48 = scmp.eq.s32.totalorder %s47, 0
    %s50 = sadd.s32 %s49, 1
    %s51 = scalar_select %p48, %s49, %s50
    %p54 = pneg %p48
    %p55 = scmp.eq.s32.totalorder %s9, 1
    %p56 = por %p54, %p55
    %p57 = scmp.ne.s32.totalorder %s49, %s52
    %p58 = scmp.eq.s32.totalorder %s9, 0
    %p59 = por %p57, %p58
    %p60 = scmp.ne.s32.totalorder %s49, %s52
    %p61 = scmp.eq.s32.totalorder %s14, 1
    %p62 = por %p60, %p61
    %p63 = scmp.ne.s32.totalorder %s52, %s53
    %p64 = scmp.eq.s32.totalorder %s14, 0
    %p65 = por %p63, %p64
    %p66 = scmp.ne.s32.totalorder %s52, %s53
    %p67 = scmp.eq.s32.totalorder %s15, 1
    %p68 = por %p66, %p67
    %p70 = scmp.ne.s32.totalorder %s53, %s69
    %p71 = scmp.eq.s32.totalorder %s15, 0
    %p72 = por %p70, %p71
    %s73 = ssub.s32 %s16, %s42
    %s74 = ssub.s32 %s17, %s38
    %s75 = sor.u32 %s73, %s74
    %s76 = ssub.s32 %s19, %s30
    %s77 = sor.u32 %s75, %s76
    %p78 = scmp.eq.s32.totalorder %s77, 0
    %s80 = sadd.s32 %s79, 1
    %s81 = scalar_select %p78, %s79, %s80
    %p84 = pneg %p78
    %p85 = scmp.eq.s32.totalorder %s9, 1
    %p86 = por %p84, %p85
    %p87 = scmp.ne.s32.totalorder %s79, %s82
    %p88 = scmp.eq.s32.totalorder %s9, 0
    %p89 = por %p87, %p88
    %p90 = scmp.ne.s32.totalorder %s79, %s82
    %p91 = scmp.eq.s32.totalorder %s14, 1
    %p92 = por %p90, %p91
    %p93 = scmp.ne.s32.totalorder %s82, %s83
    %p94 = scmp.eq.s32.totalorder %s14, 0
    %p95 = por %p93, %p94
    %p96 = scmp.ne.s32.totalorder %s82, %s83
    %p97 = scmp.eq.s32.totalorder %s15, 1
    %p98 = por %p96, %p97
    %p100 = scmp.ne.s32.totalorder %s83, %s99
    %p101 = scmp.eq.s32.totalorder %s15, 0
    %p102 = por %p100, %p101
    %s103 = ssub.s32 %s16, %s42
    %s104 = ssub.s32 %s17, %s38
    %s105 = sor.u32 %s103, %s104
    %s106 = ssub.s32 %s19, %s30
    %s107 = sor.u32 %s105, %s106
    %p108 = scmp.eq.s32.totalorder %s107, 0
    %s110 = sadd.s32 %s109, 1
    %s111 = scalar_select %p108, %s109, %s110
    %p114 = pneg %p108
    %p115 = scmp.eq.s32.totalorder %s9, 1
    %p116 = por %p114, %p115
    %p117 = scmp.ne.s32.totalorder %s109, %s112
    %p118 = scmp.eq.s32.totalorder %s9, 0
    %p119 = por %p117, %p118
    %p120 = scmp.ne.s32.totalorder %s109, %s112
    %p121 = scmp.eq.s32.totalorder %s14, 1
    %p122 = por %p120, %p121
    %p123 = scmp.ne.s32.totalorder %s112, %s113
    %p124 = scmp.eq.s32.totalorder %s14, 0
    %p125 = por %p123, %p124
    %p126 = scmp.ne.s32.totalorder %s112, %s113
    %p127 = scmp.eq.s32.totalorder %s15, 1
    %p128 = por %p126, %p127
    %p130 = scmp.ne.s32.totalorder %s113, %s129
    %p131 = scmp.eq.s32.totalorder %s15, 0
    %p132 = por %p130, %p131
    %s133 = ssub.s32 %s16, %s42
    %s134 = ssub.s32 %s17, %s38
    %s135 = sor.u32 %s133, %s134
    %s136 = ssub.s32 %s18, %s34
    %s137 = sor.u32 %s135, %s136
    %p138 = scmp.eq.s32.totalorder %s137, 0
    %s140 = sadd.s32 %s139, 1
    %s141 = scalar_select %p138, %s139, %s140
    %p144 = pneg %p138
    %p145 = scmp.eq.s32.totalorder %s9, 1
    %p146 = por %p144, %p145
    %p147 = scmp.ne.s32.totalorder %s139, %s142
    %p148 = scmp.eq.s32.totalorder %s9, 0
    %p149 = por %p147, %p148
    %p150 = scmp.ne.s32.totalorder %s139, %s142
    %p151 = scmp.eq.s32.totalorder %s14, 1
    %p152 = por %p150, %p151
    %p153 = scmp.ne.s32.totalorder %s142, %s143
    %p154 = scmp.eq.s32.totalorder %s14, 0
    %p155 = por %p153, %p154
    %p156 = scmp.ne.s32.totalorder %s142, %s143
    %p157 = scmp.eq.s32.totalorder %s15, 1
    %p158 = por %p156, %p157
    %p160 = scmp.ne.s32.totalorder %s143, %s159
    %p161 = scmp.eq.s32.totalorder %s15, 0
    %p162 = por %p160, %p161
    %p163 = scmp.le.s32.totalorder 1, %s9
    %p164 = scmp.lt.s32.totalorder %s9, 3
    %p165 = pnand %p163, %p164
    %p166 = pneg %p165
    // Predicated region
    $region9: #{attention_forward.4} parent=5 // pred_check
      _
    $region10: #{attention_forward.4} parent=5 // pred_check_branch
      %168 = sbr.rel (%p165) target = $region12
    $region11: #{attention_forward.4} parent=5 // pred_region
      %s169 = ssub.s32 %s9, 1
    $region12: #{attention_forward.4} parent=5 // pred_fallthru
      _
    %p170 = scmp.lt.s32.totalorder %s9, 2
    // Predicated region
    $region13: #{attention_forward.4} parent=5 // pred_check
      %p171 = pneg %p170
    $region14: #{attention_forward.4} parent=5 // pred_check_branch
      %173 = sbr.rel (%p171) target = $region16
    $region15: #{attention_forward.4} parent=5 // pred_region
      // Predicated region
      $region17: #{attention_forward.4} parent=15 // pred_check
        %p174 = pneg %p59
      $region18: #{attention_forward.4} parent=15 // pred_check_branch
        %176 = sbr.rel (%p174) target = $region20
      $region19: #{attention_forward.4} parent=15 // pred_region
        %s177 = smul.u32 4, %s17
        %p178 = scmp.lt.s32.totalorder %s16, 1
        %s179 = scalar_select %p178, %s16, 1
        %p180 = scmp.lt.s32.totalorder %s177, 3
        %s181 = scalar_select %p180, %s177, 3
        %p182 = scmp.lt.s32.totalorder %s18, 0
        %s183 = scalar_select %p182, %s18, 0
        %s184 = sadd.s32 %s183, %s181
        %s185 = smul.addr %s179, 4
        %s186 = sadd.s32 %s184, %s185
        %s187 = smul.addr %s186, 4
        %s188 = scalar_lea.vmem %s0, %s187
        %s189 = smul.u32 4, %s17
      $region20: #{attention_forward.4} parent=15 // pred_fallthru
        _
      // Predicated region
      $region21: #{attention_forward.4} parent=15 // pred_check
        %p190 = pneg %p89
      $region22: #{attention_forward.4} parent=15 // pred_check_branch
        %192 = sbr.rel (%p190) target = $region24
      $region23: #{attention_forward.4} parent=15 // pred_region
        %s193 = smul.u32 4, %s17
        %p194 = scmp.lt.s32.totalorder %s16, 1
        %s195 = scalar_select %p194, %s16, 1
        %p196 = scmp.lt.s32.totalorder %s193, 3
        %s197 = scalar_select %p196, %s193, 3
        %p198 = scmp.lt.s32.totalorder %s19, 0
        %s199 = scalar_select %p198, %s19, 0
        %s200 = sadd.s32 %s199, %s197
        %s201 = smul.addr %s195, 4
        %s202 = sadd.s32 %s200, %s201
        %s203 = smul.addr %s202, 4
        %s204 = scalar_lea.vmem %s1, %s203
        %s205 = smul.u32 4, %s17
      $region24: #{attention_forward.4} parent=15 // pred_fallthru
        _
      // Predicated region
      $region25: #{attention_forward.4} parent=15 // pred_check
        %p206 = pneg %p119
      $region26: #{attention_forward.4} parent=15 // pred_check_branch
        %208 = sbr.rel (%p206) target = $region28
      $region27: #{attention_forward.4} parent=15 // pred_region
        %s209 = smul.u32 4, %s17
        %p210 = scmp.lt.s32.totalorder %s16, 1
        %s211 = scalar_select %p210, %s16, 1
        %p212 = scmp.lt.s32.totalorder %s209, 3
        %s213 = scalar_select %p212, %s209, 3
        %p214 = scmp.lt.s32.totalorder %s19, 0
        %s215 = scalar_select %p214, %s19, 0
        %s216 = sadd.s32 %s215, %s213
        %s217 = smul.addr %s211, 4
        %s218 = sadd.s32 %s216, %s217
        %s219 = smul.addr %s218, 4
        %s220 = scalar_lea.vmem %s2, %s219
        %s221 = smul.u32 4, %s17
      $region28: #{attention_forward.4} parent=15 // pred_fallthru
        _
    $region16: #{attention_forward.4} parent=5 // pred_fallthru
      _
    %p222 = scmp.le.s32.totalorder 1, %s9
    %p223 = scmp.lt.s32.totalorder %s9, 3
    %p224 = pnand %p222, %p223
    %p225 = pneg %p224
    // Predicated region
    $region29: #{attention_forward.4} parent=5 // pred_check
      _
    $region30: #{attention_forward.4} parent=5 // pred_check_branch
      %227 = sbr.rel (%p224) target = $region32
    $region31: #{attention_forward.4} parent=5 // pred_region
      %s228 = ssub.s32 %s9, 1
      %s229 = smul.u32 4, %s21
      %p230 = scmp.lt.s32.totalorder %s20, 1
      %s231 = scalar_select %p230, %s20, 1
      %p232 = scmp.lt.s32.totalorder %s229, 3
      %s233 = scalar_select %p232, %s229, 3
      %p234 = scmp.lt.s32.totalorder %s22, 0
      %s235 = scalar_select %p234, %s22, 0
      %s236 = sadd.s32 %s235, %s233
      %s237 = smul.addr %s231, 4
      %s238 = sadd.s32 %s236, %s237
      %s239 = smul.addr %s238, 4
      %s240 = scalar_lea.vmem %s0, %s239
      %p241 = pneg %p65
      %p242 = pneg %p62
      %s243 = smul.u32 4, %s21
      %p244 = scmp.lt.s32.totalorder %s20, 1
      %s245 = scalar_select %p244, %s20, 1
      %p246 = scmp.lt.s32.totalorder %s243, 3
      %s247 = scalar_select %p246, %s243, 3
      %p248 = scmp.lt.s32.totalorder %s23, 0
      %s249 = scalar_select %p248, %s23, 0
      %s250 = sadd.s32 %s249, %s247
      %s251 = smul.addr %s245, 4
      %s252 = sadd.s32 %s250, %s251
      %s253 = smul.addr %s252, 4
      %s254 = scalar_lea.vmem %s1, %s253
      %p255 = pneg %p95
      %p256 = pneg %p92
      %s257 = smul.u32 4, %s21
      %p258 = scmp.lt.s32.totalorder %s20, 1
      %s259 = scalar_select %p258, %s20, 1
      %p260 = scmp.lt.s32.totalorder %s257, 3
      %s261 = scalar_select %p260, %s257, 3
      %p262 = scmp.lt.s32.totalorder %s23, 0
      %s263 = scalar_select %p262, %s23, 0
      %s264 = sadd.s32 %s263, %s261
      %s265 = smul.addr %s259, 4
      %s266 = sadd.s32 %s264, %s265
      %s267 = smul.addr %s266, 4
      %s268 = scalar_lea.vmem %s2, %s267
      %p269 = pneg %p125
      %p270 = pneg %p122
      %p271 = pneg %p155
      %p272 = pneg %p152
      %s273 = smul.u32 4, %s21
      %p274 = scmp.lt.s32.totalorder %s20, 1
      %s275 = scalar_select %p274, %s20, 1
      %p276 = scmp.lt.s32.totalorder %s273, 3
      %s277 = scalar_select %p276, %s273, 3
      %p278 = scmp.lt.s32.totalorder %s22, 0
      %s279 = scalar_select %p278, %s22, 0
      %s280 = sadd.s32 %s279, %s277
      %s281 = smul.addr %s275, 4
      %s282 = sadd.s32 %s280, %s281
      %s283 = smul.addr %s282, 4
      %s284 = scalar_lea.vmem %s3, %s283
      %s285 = smul.u32 4, %s21
      %p286 = scmp.lt.s32.totalorder %s20, 1
      %s287 = scalar_select %p286, %s20, 1
      %p288 = scmp.lt.s32.totalorder %s285, 3
      %s289 = scalar_select %p288, %s285, 3
      %p290 = scmp.lt.s32.totalorder %s22, 0
      %s291 = scalar_select %p290, %s22, 0
      %s292 = sadd.s32 %s291, %s289
      %s293 = smul.addr %s287, 4
      %s294 = sadd.s32 %s292, %s293
      %s295 = smul.addr %s294, 4
      %s296 = scalar_lea.vmem %s0, %s295
      %s297 = smul.u32 4, %s21
      %s298 = smul.u32 4, %s21
      %p299 = scmp.lt.s32.totalorder %s20, 1
      %s300 = scalar_select %p299, %s20, 1
      %p301 = scmp.lt.s32.totalorder %s298, 3
      %s302 = scalar_select %p301, %s298, 3
      %p303 = scmp.lt.s32.totalorder %s23, 0
      %s304 = scalar_select %p303, %s23, 0
      %s305 = sadd.s32 %s304, %s302
      %s306 = smul.addr %s300, 4
      %s307 = sadd.s32 %s305, %s306
      %s308 = smul.addr %s307, 4
      %s309 = scalar_lea.vmem %s1, %s308
      %s310 = smul.u32 4, %s21
      %s311 = smul.u32 4, %s21
      %p312 = scmp.lt.s32.totalorder %s20, 1
      %s313 = scalar_select %p312, %s20, 1
      %p314 = scmp.lt.s32.totalorder %s311, 3
      %s315 = scalar_select %p314, %s311, 3
      %p316 = scmp.lt.s32.totalorder %s23, 0
      %s317 = scalar_select %p316, %s23, 0
      %s318 = sadd.s32 %s317, %s315
      %s319 = smul.addr %s313, 4
      %s320 = sadd.s32 %s318, %s319
      %s321 = smul.addr %s320, 4
      %s322 = scalar_lea.vmem %s2, %s321
      %s323 = smul.u32 4, %s21
      %s324 = smul.u32 4, %s21
      %p325 = scmp.lt.s32.totalorder %s20, 1
      %s326 = scalar_select %p325, %s20, 1
      %p327 = scmp.lt.s32.totalorder %s324, 3
      %s328 = scalar_select %p327, %s324, 3
      %p329 = scmp.lt.s32.totalorder %s22, 0
      %s330 = scalar_select %p329, %s22, 0
      %s331 = sadd.s32 %s330, %s328
      %s332 = smul.addr %s326, 4
      %s333 = sadd.s32 %s331, %s332
      %s334 = smul.addr %s333, 4
      %s335 = scalar_lea.vmem %s3, %s334
      %s336 = smul.u32 4, %s21
      %p338 = scmp.eq.s32.totalorder %s23, 0
      // Predicated region
      $region33: #{attention_forward.4} parent=31 // pred_check
        %p339 = pneg %p338
      $region34: #{attention_forward.4} parent=31 // pred_check_branch
        %341 = sbr.rel (%p339) target = $region36
      $region35: #{attention_forward.4} parent=31 // pred_region
        %vm342 = vcmask 7168
        %343 = vst.msk [vmem:[#allocation2] sm:$0xff] %vm342, -inf
        %344 = vst.msk [vmem:[#allocation2 + $0x8] sm:$0xff] %vm342, -inf
        %345 = vst.msk [vmem:[#allocation2 + $0x10] sm:$0xff] %vm342, -inf
        %346 = vst.msk [vmem:[#allocation2 + $0x18] sm:$0xff] %vm342, -inf
        %347 = vst.msk [vmem:[#allocation3] sm:$0xff] %vm342, 0.0
        %348 = vst.msk [vmem:[#allocation3 + $0x8] sm:$0xff] %vm342, 0.0
        %349 = vst.msk [vmem:[#allocation3 + $0x10] sm:$0xff] %vm342, 0.0
        %350 = vst.msk [vmem:[#allocation3 + $0x18] sm:$0xff] %vm342, 0.0
        %vm351 = vcmask 64512
        %352 = vst.msk [vmem:[#allocation4] sm:$0xff] %vm351, 0.0
        %353 = vst.msk [vmem:[#allocation4 + $0x8] sm:$0xff] %vm351, 0.0
        %354 = vst.msk [vmem:[#allocation4 + $0x10] sm:$0xff] %vm351, 0.0
        %355 = vst.msk [vmem:[#allocation4 + $0x18] sm:$0xff] %vm351, 0.0
      $region36: #{attention_forward.4} parent=31 // pred_fallthru
        _
      %v356 = vld [vmem:[%s296] sm:$0xf]
      %v357 = vld [vmem:[%s296 + $0x4] sm:$0xf]
      %v358 = vld [vmem:[%s296 + $0x8] sm:$0xf]
      %v359 = vld [vmem:[%s296 + $0xc] sm:$0xf]
      %v360 = vld [vmem:[%s309] sm:$0xf]
      %v361 = vld [vmem:[%s309 + $0x4] sm:$0xf]
      %v362 = vld [vmem:[%s309 + $0x8] sm:$0xf]
      %v363 = vld [vmem:[%s309 + $0xc] sm:$0xf]
      %vm364 = vcmask 64512
      %v366 = vsel %vm364, %v356, 0
      %v369 = vsel %vm364, %v360, 0
      %371 = vmatprep.subr.bf16.mxu0 0
      %372 = vmatpush1.bf16.xpose.msra.mxu0 %v369
      %373 = vmatprep.subr.bf16.mxu0 0
      %374 = vmatpush1.bf16.xpose.msra.mxu0 0
      %375 = vmatprep.subr.bf16.mxu0 0
      %376 = vmatpush1.bf16.xpose.msra.mxu0 0
      %377 = vmatprep.subr.bf16.mxu0 0
      %378 = vmatpush1.bf16.xpose.msra.mxu0 0
      %379 = vmatprep.subr.bf16.mxu0 0
      %380 = vmatpush1.bf16.xpose.msra.mxu0 0
      %381 = vmatprep.subr.bf16.mxu0 0
      %382 = vmatpush1.bf16.xpose.msra.mxu0 0
      %383 = vmatprep.subr.bf16.mxu0 0
      %384 = vmatpush1.bf16.xpose.msra.mxu0 0
      %385 = vmatprep.subr.bf16.mxu0 0
      %386 = vmatpush1.bf16.xpose.msra.mxu0 0
      %387 = vmatprep.subr.bf16.mxu0 0
      %388 = vmatpush1.bf16.xpose.msra.mxu0 0
      %389 = vmatprep.subr.bf16.mxu0 0
      %390 = vmatpush1.bf16.xpose.msra.mxu0 0
      %391 = vmatprep.subr.bf16.mxu0 0
      %392 = vmatpush1.bf16.xpose.msra.mxu0 0
      %393 = vmatprep.subr.bf16.mxu0 0
      %394 = vmatpush1.bf16.xpose.msra.mxu0 0
      %395 = vmatprep.subr.bf16.mxu0 0
      %396 = vmatpush1.bf16.xpose.msra.mxu0 0
      %397 = vmatprep.subr.bf16.mxu0 0
      %398 = vmatpush1.bf16.xpose.msra.mxu0 0
      %399 = vmatprep.subr.bf16.mxu0 0
      %400 = vmatpush1.bf16.xpose.msra.mxu0 0
      %401 = vmatprep.subr.bf16.mxu0 0
      %402 = vmatpush1.bf16.xpose.msra.mxu0 0
      %403 = vmatprep.mubr.bf16.mxu0 0
      %404 = vmatmul.mubr.bf16.gmra.mrb[0].mxu0 %v366
      %v405 = vpop.f32.mrb[0].mxu0
      %v406 = vadd.f32 0.0, %v405
      %v407 = vpop.f32.mrb[0].mxu0
      %v408 = vpop.f32.mrb[0].mxu0
      %v409 = vpop.f32.mrb[0].mxu0
      %410 = vdwg.mxu0
      %v412 = vsel %vm364, %v357, 0
      %v415 = vsel %vm364, %v361, 0
      %417 = vmatprep.subr.bf16.mxu0 0
      %418 = vmatpush1.bf16.xpose.msra.mxu0 %v415
      %419 = vmatprep.subr.bf16.mxu0 0
      %420 = vmatpush1.bf16.xpose.msra.mxu0 0
      %421 = vmatprep.subr.bf16.mxu0 0
      %422 = vmatpush1.bf16.xpose.msra.mxu0 0
      %423 = vmatprep.subr.bf16.mxu0 0
      %424 = vmatpush1.bf16.xpose.msra.mxu0 0
      %425 = vmatprep.subr.bf16.mxu0 0
      %426 = vmatpush1.bf16.xpose.msra.mxu0 0
      %427 = vmatprep.subr.bf16.mxu0 0
      %428 = vmatpush1.bf16.xpose.msra.mxu0 0
      %429 = vmatprep.subr.bf16.mxu0 0
      %430 = vmatpush1.bf16.xpose.msra.mxu0 0
      %431 = vmatprep.subr.bf16.mxu0 0
      %432 = vmatpush1.bf16.xpose.msra.mxu0 0
      %433 = vmatprep.subr.bf16.mxu0 0
      %434 = vmatpush1.bf16.xpose.msra.mxu0 0
      %435 = vmatprep.subr.bf16.mxu0 0
      %436 = vmatpush1.bf16.xpose.msra.mxu0 0
      %437 = vmatprep.subr.bf16.mxu0 0
      %438 = vmatpush1.bf16.xpose.msra.mxu0 0
      %439 = vmatprep.subr.bf16.mxu0 0
      %440 = vmatpush1.bf16.xpose.msra.mxu0 0
      %441 = vmatprep.subr.bf16.mxu0 0
      %442 = vmatpush1.bf16.xpose.msra.mxu0 0
      %443 = vmatprep.subr.bf16.mxu0 0
      %444 = vmatpush1.bf16.xpose.msra.mxu0 0
      %445 = vmatprep.subr.bf16.mxu0 0
      %446 = vmatpush1.bf16.xpose.msra.mxu0 0
      %447 = vmatprep.subr.bf16.mxu0 0
      %448 = vmatpush1.bf16.xpose.msra.mxu0 0
      %449 = vmatprep.mubr.bf16.mxu0 0
      %450 = vmatmul.mubr.bf16.gmra.mrb[0].mxu0 %v412
      %v451 = vpop.f32.mrb[0].mxu0
      %v452 = vadd.f32 0.0, %v451
      %v453 = vpop.f32.mrb[0].mxu0
      %v454 = vpop.f32.mrb[0].mxu0
      %v455 = vpop.f32.mrb[0].mxu0
      %456 = vdwg.mxu0
      %v458 = vsel %vm364, %v358, 0
      %v461 = vsel %vm364, %v362, 0
      %463 = vmatprep.subr.bf16.mxu0 0
      %464 = vmatpush1.bf16.xpose.msra.mxu0 %v461
      %465 = vmatprep.subr.bf16.mxu0 0
      %466 = vmatpush1.bf16.xpose.msra.mxu0 0
      %467 = vmatprep.subr.bf16.mxu0 0
      %468 = vmatpush1.bf16.xpose.msra.mxu0 0
      %469 = vmatprep.subr.bf16.mxu0 0
      %470 = vmatpush1.bf16.xpose.msra.mxu0 0
      %471 = vmatprep.subr.bf16.mxu0 0
      %472 = vmatpush1.bf16.xpose.msra.mxu0 0
      %473 = vmatprep.subr.bf16.mxu0 0
      %474 = vmatpush1.bf16.xpose.msra.mxu0 0
      %475 = vmatprep.subr.bf16.mxu0 0
      %476 = vmatpush1.bf16.xpose.msra.mxu0 0
      %477 = vmatprep.subr.bf16.mxu0 0
      %478 = vmatpush1.bf16.xpose.msra.mxu0 0
      %479 = vmatprep.subr.bf16.mxu0 0
      %480 = vmatpush1.bf16.xpose.msra.mxu0 0
      %481 = vmatprep.subr.bf16.mxu0 0
      %482 = vmatpush1.bf16.xpose.msra.mxu0 0
      %483 = vmatprep.subr.bf16.mxu0 0
      %484 = vmatpush1.bf16.xpose.msra.mxu0 0
      %485 = vmatprep.subr.bf16.mxu0 0
      %486 = vmatpush1.bf16.xpose.msra.mxu0 0
      %487 = vmatprep.subr.bf16.mxu0 0
      %488 = vmatpush1.bf16.xpose.msra.mxu0 0
      %489 = vmatprep.subr.bf16.mxu0 0
      %490 = vmatpush1.bf16.xpose.msra.mxu0 0
      %491 = vmatprep.subr.bf16.mxu0 0
      %492 = vmatpush1.bf16.xpose.msra.mxu0 0
      %493 = vmatprep.subr.bf16.mxu0 0
      %494 = vmatpush1.bf16.xpose.msra.mxu0 0
      %495 = vmatprep.mubr.bf16.mxu0 0
      %496 = vmatmul.mubr.bf16.gmra.mrb[0].mxu0 %v458
      %v497 = vpop.f32.mrb[0].mxu0
      %v498 = vadd.f32 0.0, %v497
      %v499 = vpop.f32.mrb[0].mxu0
      %v500 = vpop.f32.mrb[0].mxu0
      %v501 = vpop.f32.mrb[0].mxu0
      %502 = vdwg.mxu0
      %v504 = vsel %vm364, %v359, 0
      %v507 = vsel %vm364, %v363, 0
      %509 = vmatprep.subr.bf16.mxu0 0
      %510 = vmatpush1.bf16.xpose.msra.mxu0 %v507
      %511 = vmatprep.subr.bf16.mxu0 0
      %512 = vmatpush1.bf16.xpose.msra.mxu0 0
      %513 = vmatprep.subr.bf16.mxu0 0
      %514 = vmatpush1.bf16.xpose.msra.mxu0 0
      %515 = vmatprep.subr.bf16.mxu0 0
      %516 = vmatpush1.bf16.xpose.msra.mxu0 0
      %517 = vmatprep.subr.bf16.mxu0 0
      %518 = vmatpush1.bf16.xpose.msra.mxu0 0
      %519 = vmatprep.subr.bf16.mxu0 0
      %520 = vmatpush1.bf16.xpose.msra.mxu0 0
      %521 = vmatprep.subr.bf16.mxu0 0
      %522 = vmatpush1.bf16.xpose.msra.mxu0 0
      %523 = vmatprep.subr.bf16.mxu0 0
      %524 = vmatpush1.bf16.xpose.msra.mxu0 0
      %525 = vmatprep.subr.bf16.mxu0 0
      %526 = vmatpush1.bf16.xpose.msra.mxu0 0
      %527 = vmatprep.subr.bf16.mxu0 0
      %528 = vmatpush1.bf16.xpose.msra.mxu0 0
      %529 = vmatprep.subr.bf16.mxu0 0
      %530 = vmatpush1.bf16.xpose.msra.mxu0 0
      %531 = vmatprep.subr.bf16.mxu0 0
      %532 = vmatpush1.bf16.xpose.msra.mxu0 0
      %533 = vmatprep.subr.bf16.mxu0 0
      %534 = vmatpush1.bf16.xpose.msra.mxu0 0
      %535 = vmatprep.subr.bf16.mxu0 0
      %536 = vmatpush1.bf16.xpose.msra.mxu0 0
      %537 = vmatprep.subr.bf16.mxu0 0
      %538 = vmatpush1.bf16.xpose.msra.mxu0 0
      %539 = vmatprep.subr.bf16.mxu0 0
      %540 = vmatpush1.bf16.xpose.msra.mxu0 0
      %541 = vmatprep.mubr.bf16.mxu0 0
      %542 = vmatmul.mubr.bf16.gmra.mrb[0].mxu0 %v504
      %v543 = vpop.f32.mrb[0].mxu0
      %v544 = vadd.f32 0.0, %v543
      %v545 = vpop.f32.mrb[0].mxu0
      %v546 = vpop.f32.mrb[0].mxu0
      %v547 = vpop.f32.mrb[0].mxu0
      %548 = vdwg.mxu0
      %v549 = vld [vmem:[#allocation2] sm:$0xff]
      %v550 = vld [vmem:[#allocation2 + $0x8] sm:$0xff]
      %v551 = vld [vmem:[#allocation2 + $0x10] sm:$0xff]
      %v552 = vld [vmem:[#allocation2 + $0x18] sm:$0xff]
      %v553 = vsel %vm364, %v406, -inf
      %554 = vmax.xlane.f32.xlu0 %v553
      %v555 = vpop.xlane.xlu0 %554
      %v556 = vsel %vm364, %v452, -inf
      %557 = vmax.xlane.f32.xlu0 %v556
      %v558 = vpop.xlane.xlu0 %557
      %v559 = vsel %vm364, %v498, -inf
      %560 = vmax.xlane.f32.xlu0 %v559
      %v561 = vpop.xlane.xlu0 %560
      %v562 = vsel %vm364, %v544, -inf
      %563 = vmax.xlane.f32.xlu0 %v562
      %v564 = vpop.xlane.xlu0 %563
      %v565 = vmax.f32 %v549, %v555
      %v566 = vmax.f32 %v550, %v558
      %v567 = vmax.f32 %v551, %v561
      %v568 = vmax.f32 %v552, %v564
      %v569 = vsub.f32 %v549, %v565
      %v570 = vsub.f32 %v550, %v566
      %v571 = vsub.f32 %v551, %v567
      %v572 = vsub.f32 %v552, %v568
      %v573 = vmul.f32 %v569, 1.442695
      %v574 = vpow.pop %v573
      %v575 = vmul.f32 %v570, 1.442695
      %v576 = vpow.pop %v575
      %v577 = vmul.f32 %v571, 1.442695
      %v578 = vpow.pop %v577
      %v579 = vmul.f32 %v572, 1.442695
      %v580 = vpow.pop %v579
      %582 = vset.pattern.permute.xlu0 0
      %583 = vperm.xlu0 %582, %v565
      %v584 = vpop.permute.xlu0 %583
      %587 = vset.pattern.permute.xlu0 0
      %588 = vperm.xlu0 %587, %v566
      %v589 = vpop.permute.xlu0 %588
      %592 = vset.pattern.permute.xlu0 0
      %593 = vperm.xlu0 %592, %v567
      %v594 = vpop.permute.xlu0 %593
      %597 = vset.pattern.permute.xlu0 0
      %598 = vperm.xlu0 %597, %v568
      %v599 = vpop.permute.xlu0 %598
      %v601 = vsub.f32 %v406, %v584
      %v602 = vsub.f32 %v452, %v589
      %v603 = vsub.f32 %v498, %v594
      %v604 = vsub.f32 %v544, %v599
      %v605 = vmul.f32 %v601, 1.442695
      %v606 = vpow.pop %v605
      %v607 = vmul.f32 %v602, 1.442695
      %v608 = vpow.pop %v607
      %v609 = vmul.f32 %v603, 1.442695
      %v610 = vpow.pop %v609
      %v611 = vmul.f32 %v604, 1.442695
      %v612 = vpow.pop %v611
      %v613 = vld [vmem:[#allocation3] sm:$0xff]
      %v614 = vld [vmem:[#allocation3 + $0x8] sm:$0xff]
      %v615 = vld [vmem:[#allocation3 + $0x10] sm:$0xff]
      %v616 = vld [vmem:[#allocation3 + $0x18] sm:$0xff]
      %v617 = vmul.f32 %v574, %v613
      %v618 = vmul.f32 %v576, %v614
      %v619 = vmul.f32 %v578, %v615
      %v620 = vmul.f32 %v580, %v616
      %v621 = vsel %vm364, %v606, 0.0
      %622 = vadd.xlane.f32.xlu0 %v621
      %v623 = vpop.xlane.xlu0 %622
      %v624 = vsel %vm364, %v608, 0.0
      %625 = vadd.xlane.f32.xlu0 %v624
      %v626 = vpop.xlane.xlu0 %625
      %v627 = vsel %vm364, %v610, 0.0
      %628 = vadd.xlane.f32.xlu0 %v627
      %v629 = vpop.xlane.xlu0 %628
      %v630 = vsel %vm364, %v612, 0.0
      %631 = vadd.xlane.f32.xlu0 %v630
      %v632 = vpop.xlane.xlu0 %631
      %v633 = vadd.f32 %v617, %v623
      %v634 = vadd.f32 %v618, %v626
      %v635 = vadd.f32 %v619, %v629
      %v636 = vadd.f32 %v620, %v632
      %vm637 = vcmask 7168
      %638 = vst.msk [vmem:[#allocation3] sm:$0xff] %vm637, %v633
      %639 = vst.msk [vmem:[#allocation3 + $0x8] sm:$0xff] %vm637, %v634
      %640 = vst.msk [vmem:[#allocation3 + $0x10] sm:$0xff] %vm637, %v635
      %641 = vst.msk [vmem:[#allocation3 + $0x18] sm:$0xff] %vm637, %v636
      %v642 = vld [vmem:[#allocation4] sm:$0xff]
      %v643 = vld [vmem:[#allocation4 + $0x8] sm:$0xff]
      %v644 = vld [vmem:[#allocation4 + $0x10] sm:$0xff]
      %v645 = vld [vmem:[#allocation4 + $0x18] sm:$0xff]
      %647 = vset.pattern.permute.xlu0 0
      %648 = vperm.xlu0 %647, %v574
      %v649 = vpop.permute.xlu0 %648
      %652 = vset.pattern.permute.xlu0 0
      %653 = vperm.xlu0 %652, %v576
      %v654 = vpop.permute.xlu0 %653
      %657 = vset.pattern.permute.xlu0 0
      %658 = vperm.xlu0 %657, %v578
      %v659 = vpop.permute.xlu0 %658
      %662 = vset.pattern.permute.xlu0 0
      %663 = vperm.xlu0 %662, %v580
      %v664 = vpop.permute.xlu0 %663
      %v666 = vmul.f32 %v649, %v642
      %v667 = vmul.f32 %v654, %v643
      %v668 = vmul.f32 %v659, %v644
      %v669 = vmul.f32 %v664, %v645
      %v670 = vpack.c.bf16 %v606, %v606
      %v671 = vpack.c.bf16 %v608, %v608
      %v672 = vpack.c.bf16 %v610, %v610
      %v673 = vpack.c.bf16 %v612, %v612
      %v674 = vld [vmem:[%s322] sm:$0xf]
      %v675 = vld [vmem:[%s322 + $0x4] sm:$0xf]
      %v676 = vld [vmem:[%s322 + $0x8] sm:$0xf]
      %v677 = vld [vmem:[%s322 + $0xc] sm:$0xf]
      %v679 = vsel %vm364, %v670, 0
      %vm681 = vcmask 1043456
      %v683 = vsel %vm681, %v674, 0
      %685 = vmatprep.subr.bf16.mxu0 0
      %686 = vmatpush1.bf16.msra.mxu0 %v683
      %687 = vmatprep.subr.bf16.mxu0 0
      %688 = vmatpush1.bf16.msra.mxu0 0
      %689 = vmatprep.subr.bf16.mxu0 0
      %690 = vmatpush1.bf16.msra.mxu0 0
      %691 = vmatprep.subr.bf16.mxu0 0
      %692 = vmatpush1.bf16.msra.mxu0 0
      %693 = vmatprep.subr.bf16.mxu0 0
      %694 = vmatpush1.bf16.msra.mxu0 0
      %695 = vmatprep.subr.bf16.mxu0 0
      %696 = vmatpush1.bf16.msra.mxu0 0
      %697 = vmatprep.subr.bf16.mxu0 0
      %698 = vmatpush1.bf16.msra.mxu0 0
      %699 = vmatprep.subr.bf16.mxu0 0
      %700 = vmatpush1.bf16.msra.mxu0 0
      %701 = vmatprep.subr.bf16.mxu0 0
      %702 = vmatpush1.bf16.msra.mxu0 0
      %703 = vmatprep.subr.bf16.mxu0 0
      %704 = vmatpush1.bf16.msra.mxu0 0
      %705 = vmatprep.subr.bf16.mxu0 0
      %706 = vmatpush1.bf16.msra.mxu0 0
      %707 = vmatprep.subr.bf16.mxu0 0
      %708 = vmatpush1.bf16.msra.mxu0 0
      %709 = vmatprep.subr.bf16.mxu0 0
      %710 = vmatpush1.bf16.msra.mxu0 0
      %711 = vmatprep.subr.bf16.mxu0 0
      %712 = vmatpush1.bf16.msra.mxu0 0
      %713 = vmatprep.subr.bf16.mxu0 0
      %714 = vmatpush1.bf16.msra.mxu0 0
      %715 = vmatprep.subr.bf16.mxu0 0
      %716 = vmatpush1.bf16.msra.mxu0 0
      %717 = vmatprep.mubr.bf16.mxu0 0
      %718 = vmatmul.mubr.bf16.gmra.mrb[0].mxu0 %v679
      %v719 = vpop.f32.mrb[0].mxu0
      %v720 = vadd.f32 0.0, %v719
      %v721 = vpop.f32.mrb[0].mxu0
      %v722 = vpop.f32.mrb[0].mxu0
      %v723 = vpop.f32.mrb[0].mxu0
      %724 = vdwg.mxu0
      %v726 = vsel %vm364, %v671, 0
      %v729 = vsel %vm681, %v675, 0
      %731 = vmatprep.subr.bf16.mxu0 0
      %732 = vmatpush1.bf16.msra.mxu0 %v729
      %733 = vmatprep.subr.bf16.mxu0 0
      %734 = vmatpush1.bf16.msra.mxu0 0
      %735 = vmatprep.subr.bf16.mxu0 0
      %736 = vmatpush1.bf16.msra.mxu0 0
      %737 = vmatprep.subr.bf16.mxu0 0
      %738 = vmatpush1.bf16.msra.mxu0 0
      %739 = vmatprep.subr.bf16.mxu0 0
      %740 = vmatpush1.bf16.msra.mxu0 0
      %741 = vmatprep.subr.bf16.mxu0 0
      %742 = vmatpush1.bf16.msra.mxu0 0
      %743 = vmatprep.subr.bf16.mxu0 0
      %744 = vmatpush1.bf16.msra.mxu0 0
      %745 = vmatprep.subr.bf16.mxu0 0
      %746 = vmatpush1.bf16.msra.mxu0 0
      %747 = vmatprep.subr.bf16.mxu0 0
      %748 = vmatpush1.bf16.msra.mxu0 0
      %749 = vmatprep.subr.bf16.mxu0 0
      %750 = vmatpush1.bf16.msra.mxu0 0
      %751 = vmatprep.subr.bf16.mxu0 0
      %752 = vmatpush1.bf16.msra.mxu0 0
      %753 = vmatprep.subr.bf16.mxu0 0
      %754 = vmatpush1.bf16.msra.mxu0 0
      %755 = vmatprep.subr.bf16.mxu0 0
      %756 = vmatpush1.bf16.msra.mxu0 0
      %757 = vmatprep.subr.bf16.mxu0 0
      %758 = vmatpush1.bf16.msra.mxu0 0
      %759 = vmatprep.subr.bf16.mxu0 0
      %760 = vmatpush1.bf16.msra.mxu0 0
      %761 = vmatprep.subr.bf16.mxu0 0
      %762 = vmatpush1.bf16.msra.mxu0 0
      %763 = vmatprep.mubr.bf16.mxu0 0
      %764 = vmatmul.mubr.bf16.gmra.mrb[0].mxu0 %v726
      %v765 = vpop.f32.mrb[0].mxu0
      %v766 = vadd.f32 0.0, %v765
      %v767 = vpop.f32.mrb[0].mxu0
      %v768 = vpop.f32.mrb[0].mxu0
      %v769 = vpop.f32.mrb[0].mxu0
      %770 = vdwg.mxu0
      %v772 = vsel %vm364, %v672, 0
      %v775 = vsel %vm681, %v676, 0
      %777 = vmatprep.subr.bf16.mxu0 0
      %778 = vmatpush1.bf16.msra.mxu0 %v775
      %779 = vmatprep.subr.bf16.mxu0 0
      %780 = vmatpush1.bf16.msra.mxu0 0
      %781 = vmatprep.subr.bf16.mxu0 0
      %782 = vmatpush1.bf16.msra.mxu0 0
      %783 = vmatprep.subr.bf16.mxu0 0
      %784 = vmatpush1.bf16.msra.mxu0 0
      %785 = vmatprep.subr.bf16.mxu0 0
      %786 = vmatpush1.bf16.msra.mxu0 0
      %787 = vmatprep.subr.bf16.mxu0 0
      %788 = vmatpush1.bf16.msra.mxu0 0
      %789 = vmatprep.subr.bf16.mxu0 0
      %790 = vmatpush1.bf16.msra.mxu0 0
      %791 = vmatprep.subr.bf16.mxu0 0
      %792 = vmatpush1.bf16.msra.mxu0 0
      %793 = vmatprep.subr.bf16.mxu0 0
      %794 = vmatpush1.bf16.msra.mxu0 0
      %795 = vmatprep.subr.bf16.mxu0 0
      %796 = vmatpush1.bf16.msra.mxu0 0
      %797 = vmatprep.subr.bf16.mxu0 0
      %798 = vmatpush1.bf16.msra.mxu0 0
      %799 = vmatprep.subr.bf16.mxu0 0
      %800 = vmatpush1.bf16.msra.mxu0 0
      %801 = vmatprep.subr.bf16.mxu0 0
      %802 = vmatpush1.bf16.msra.mxu0 0
      %803 = vmatprep.subr.bf16.mxu0 0
      %804 = vmatpush1.bf16.msra.mxu0 0
      %805 = vmatprep.subr.bf16.mxu0 0
      %806 = vmatpush1.bf16.msra.mxu0 0
      %807 = vmatprep.subr.bf16.mxu0 0
      %808 = vmatpush1.bf16.msra.mxu0 0
      %809 = vmatprep.mubr.bf16.mxu0 0
      %810 = vmatmul.mubr.bf16.gmra.mrb[0].mxu0 %v772
      %v811 = vpop.f32.mrb[0].mxu0
      %v812 = vadd.f32 0.0, %v811
      %v813 = vpop.f32.mrb[0].mxu0
      %v814 = vpop.f32.mrb[0].mxu0
      %v815 = vpop.f32.mrb[0].mxu0
      %816 = vdwg.mxu0
      %v818 = vsel %vm364, %v673, 0
      %v821 = vsel %vm681, %v677, 0
      %823 = vmatprep.subr.bf16.mxu0 0
      %824 = vmatpush1.bf16.msra.mxu0 %v821
      %825 = vmatprep.subr.bf16.mxu0 0
      %826 = vmatpush1.bf16.msra.mxu0 0
      %827 = vmatprep.subr.bf16.mxu0 0
      %828 = vmatpush1.bf16.msra.mxu0 0
      %829 = vmatprep.subr.bf16.mxu0 0
      %830 = vmatpush1.bf16.msra.mxu0 0
      %831 = vmatprep.subr.bf16.mxu0 0
      %832 = vmatpush1.bf16.msra.mxu0 0
      %833 = vmatprep.subr.bf16.mxu0 0
      %834 = vmatpush1.bf16.msra.mxu0 0
      %835 = vmatprep.subr.bf16.mxu0 0
      %836 = vmatpush1.bf16.msra.mxu0 0
      %837 = vmatprep.subr.bf16.mxu0 0
      %838 = vmatpush1.bf16.msra.mxu0 0
      %839 = vmatprep.subr.bf16.mxu0 0
      %840 = vmatpush1.bf16.msra.mxu0 0
      %841 = vmatprep.subr.bf16.mxu0 0
      %842 = vmatpush1.bf16.msra.mxu0 0
      %843 = vmatprep.subr.bf16.mxu0 0
      %844 = vmatpush1.bf16.msra.mxu0 0
      %845 = vmatprep.subr.bf16.mxu0 0
      %846 = vmatpush1.bf16.msra.mxu0 0
      %847 = vmatprep.subr.bf16.mxu0 0
      %848 = vmatpush1.bf16.msra.mxu0 0
      %849 = vmatprep.subr.bf16.mxu0 0
      %850 = vmatpush1.bf16.msra.mxu0 0
      %851 = vmatprep.subr.bf16.mxu0 0
      %852 = vmatpush1.bf16.msra.mxu0 0
      %853 = vmatprep.subr.bf16.mxu0 0
      %854 = vmatpush1.bf16.msra.mxu0 0
      %855 = vmatprep.mubr.bf16.mxu0 0
      %856 = vmatmul.mubr.bf16.gmra.mrb[0].mxu0 %v818
      %v857 = vpop.f32.mrb[0].mxu0
      %v858 = vadd.f32 0.0, %v857
      %v859 = vpop.f32.mrb[0].mxu0
      %v860 = vpop.f32.mrb[0].mxu0
      %v861 = vpop.f32.mrb[0].mxu0
      %862 = vdwg.mxu0
      %v863 = vadd.f32 %v666, %v720
      %v864 = vadd.f32 %v667, %v766
      %v865 = vadd.f32 %v668, %v812
      %v866 = vadd.f32 %v669, %v858
      %867 = vst.msk [vmem:[#allocation4] sm:$0xff] %vm364, %v863
      %868 = vst.msk [vmem:[#allocation4 + $0x8] sm:$0xff] %vm364, %v864
      %869 = vst.msk [vmem:[#allocation4 + $0x10] sm:$0xff] %vm364, %v865
      %870 = vst.msk [vmem:[#allocation4 + $0x18] sm:$0xff] %vm364, %v866
      %871 = vst.msk [vmem:[#allocation2] sm:$0xff] %vm637, %v565
      %872 = vst.msk [vmem:[#allocation2 + $0x8] sm:$0xff] %vm637, %v566
      %873 = vst.msk [vmem:[#allocation2 + $0x10] sm:$0xff] %vm637, %v567
      %874 = vst.msk [vmem:[#allocation2 + $0x18] sm:$0xff] %vm637, %v568
      // Predicated region
      $region37: #{attention_forward.4} parent=31 // pred_check
        %p875 = pneg %p338
      $region38: #{attention_forward.4} parent=31 // pred_check_branch
        %877 = sbr.rel (%p875) target = $region40
      $region39: #{attention_forward.4} parent=31 // pred_region
        %v878 = vld [vmem:[#allocation3] sm:$0xff]
        %v879 = vld [vmem:[#allocation3 + $0x8] sm:$0xff]
        %v880 = vld [vmem:[#allocation3 + $0x10] sm:$0xff]
        %v881 = vld [vmem:[#allocation3 + $0x18] sm:$0xff]
        %v882 = vrcp.pop %v878
        %v883 = vrcp.pop %v879
        %v884 = vrcp.pop %v880
        %v885 = vrcp.pop %v881
        %v886 = vld [vmem:[#allocation4] sm:$0xff]
        %v887 = vld [vmem:[#allocation4 + $0x8] sm:$0xff]
        %v888 = vld [vmem:[#allocation4 + $0x10] sm:$0xff]
        %v889 = vld [vmem:[#allocation4 + $0x18] sm:$0xff]
        %891 = vset.pattern.permute.xlu0 0
        %892 = vperm.xlu0 %891, %v882
        %v893 = vpop.permute.xlu0 %892
        %896 = vset.pattern.permute.xlu0 0
        %897 = vperm.xlu0 %896, %v883
        %v898 = vpop.permute.xlu0 %897
        %901 = vset.pattern.permute.xlu0 0
        %902 = vperm.xlu0 %901, %v884
        %v903 = vpop.permute.xlu0 %902
        %906 = vset.pattern.permute.xlu0 0
        %907 = vperm.xlu0 %906, %v885
        %v908 = vpop.permute.xlu0 %907
        %v910 = vmul.f32 %v886, %v893
        %v911 = vmul.f32 %v887, %v898
        %v912 = vmul.f32 %v888, %v903
        %v913 = vmul.f32 %v889, %v908
        %v914 = vpack.c.bf16 %v910, %v910
        %v915 = vpack.c.bf16 %v911, %v911
        %v916 = vpack.c.bf16 %v912, %v912
        %v917 = vpack.c.bf16 %v913, %v913
        %vm918 = vcmask 60416
        %919 = vst.msk [vmem:[%s335] sm:$0xf] %vm918, %v914
        %920 = vst.msk [vmem:[%s335 + $0x4] sm:$0xf] %vm918, %v915
        %921 = vst.msk [vmem:[%s335 + $0x8] sm:$0xf] %vm918, %v916
        %922 = vst.msk [vmem:[%s335 + $0xc] sm:$0xf] %vm918, %v917
      $region40: #{attention_forward.4} parent=31 // pred_fallthru
        _
      %s923 = smul.u32 4, %s21
      %p924 = scmp.lt.s32.totalorder %s20, 1
      %s925 = scalar_select %p924, %s20, 1
      %p926 = scmp.lt.s32.totalorder %s923, 3
      %s927 = scalar_select %p926, %s923, 3
      %p928 = scmp.lt.s32.totalorder %s22, 0
      %s929 = scalar_select %p928, %s22, 0
      %s930 = sadd.s32 %s929, %s927
      %s931 = smul.addr %s925, 4
      %s932 = sadd.s32 %s930, %s931
      %s933 = smul.addr %s932, 4
      %s934 = scalar_lea.vmem %s3, %s933
      // Predicated region
      $region41: #{attention_forward.4} parent=31 // pred_check
        %p935 = pneg %p152
      $region42: #{attention_forward.4} parent=31 // pred_check_branch
        %937 = sbr.rel (%p935) target = $region44
      $region43: #{attention_forward.4} parent=31 // pred_region
        %s938 = smul.u32 4, %s21
      $region44: #{attention_forward.4} parent=31 // pred_fallthru
        _
    $region32: #{attention_forward.4} parent=5 // pred_fallthru
      _
    %p939 = scmp.le.s32.totalorder 2, %s9
    // Predicated region
    $region45: #{attention_forward.4} parent=5 // pred_check
      %p940 = pneg %p939
    $region46: #{attention_forward.4} parent=5 // pred_check_branch
      %942 = sbr.rel (%p940) target = $region48
    $region47: #{attention_forward.4} parent=5 // pred_region
      %s943 = ssub.s32 %s9, 2
      // Predicated region
      $region49: #{attention_forward.4} parent=47 // pred_check
        %p944 = pneg %p158
      $region50: #{attention_forward.4} parent=47 // pred_check_branch
        %946 = sbr.rel (%p944) target = $region52
      $region51: #{attention_forward.4} parent=47 // pred_region
        %s947 = smul.u32 4, %s25
        %p948 = scmp.lt.s32.totalorder %s24, 1
        %s949 = scalar_select %p948, %s24, 1
        %p950 = scmp.lt.s32.totalorder %s947, 3
        %s951 = scalar_select %p950, %s947, 3
        %p952 = scmp.lt.s32.totalorder %s26, 0
        %s953 = scalar_select %p952, %s26, 0
        %s954 = sadd.s32 %s953, %s951
        %s955 = smul.addr %s949, 4
        %s956 = sadd.s32 %s954, %s955
        %s957 = smul.addr %s956, 4
        %s958 = scalar_lea.vmem %s3, %s957
      $region52: #{attention_forward.4} parent=47 // pred_fallthru
        _
    $region48: #{attention_forward.4} parent=5 // pred_fallthru
      _
  $region6: #{attention_forward.4} parent=0 // loop_footer
    %s13 = sadd.s32 1, %s9
  $region7: #{attention_forward.4} parent=0 // loop_footer_branch
    %8 = sbr.rel target = $region3
  $region8: #{attention_forward.4} parent=0 // loop_exit
    _

</llo_original>
